<compile_context>
chip_gen: v6e
topology: v6e:2x2x1
jax: 0.10.0
libtpu: 0.0.40
codegen_flags: <defaults>
</compile_context>

<pallas_src>
import functools
import math

import jax
import jax.numpy as jnp
from jax.experimental import pallas as pl
from jax.experimental.pallas import tpu as pltpu


# ---------------------------------------------------------------------------
# Fused Pallas kernel: all coupling steps + final log_pz
# ---------------------------------------------------------------------------
def _timeflow_fused_kernel(x_ref, p_ref, z_ref, stats_ref, zbuf,
                           *, flips, k, d, hidden, n_out_max):
    H = hidden
    NOM = n_out_max
    B = x_ref.shape[0]

    zbuf[...] = x_ref[...]                                   # z resident in VMEM
    total_lj = jnp.zeros((B, 1), jnp.float32)

    for f, flip in enumerate(flips):                         # unrolled (static)
        slab = p_ref[f]                                      # (2H+6, C) tiny
        W = slab[0:2 * H + 1, 0:2 * NOM]                     # blockdiag [sig|mu] + bias row
        wv_s = slab[2 * H + 1:2 * H + 2, 0:H]                # (1, H)
        bv_s = slab[2 * H + 2:2 * H + 3, 0:H]
        wv_m = slab[2 * H + 3:2 * H + 4, 0:H]
        bv_m = slab[2 * H + 4:2 * H + 5, 0:H]
        A_s = slab[2 * H + 5:2 * H + 6, 0:1]                 # (1, 1) broadcast scalars
        C_s = slab[2 * H + 5:2 * H + 6, 1:2]
        A_m = slab[2 * H + 5:2 * H + 6, 2:3]
        C_m = slab[2 * H + 5:2 * H + 6, 3:4]

        if flip:
            x1 = zbuf[:, k:]                                 # (B, d-k) conditioning half
            x2 = zbuf[:, :k]                                 # (B, k)   transformed half
        else:
            x1 = zbuf[:, :k]
            x2 = zbuf[:, k:]
        n_out = x2.shape[1]

        def pooled_head(A, Cc, wv, bv, x1=x1):
            # closed-form single-head attention over scalar tokens (see header)
            coef = x1 * A + Cc                               # (B, n_in)
            s = coef[:, :, None] * x1[:, None, :]            # (B, n_in, n_in)
            s = s - jnp.max(s, axis=-1, keepdims=True)
            e = jnp.exp(s)
            pr = e / jnp.sum(e, axis=-1, keepdims=True)      # softmax over keys
            m = jnp.sum(pr * x1[:, None, :], axis=-1)        # (B, n_in)
            h = jax.nn.sigmoid(m[:, :, None] * wv[None, :, :] + bv[None, :, :])
            return jnp.mean(h, axis=1)                       # (B, H)

        pooled = jnp.concatenate(
            [pooled_head(A_s, C_s, wv_s, bv_s),
             pooled_head(A_m, C_m, wv_m, bv_m)], axis=-1)    # (B, 2H)

        # one matmul emits [sig | mu] together (bias folded into last W row)
        # NOTE: cast operands to bf16 here if H / n_out are ever scaled to
        # MXU-relevant sizes (v6e/v7x are bf16-native).
        out = (jnp.dot(pooled, W[0:2 * H, :],
                       preferred_element_type=jnp.float32)
               + W[2 * H:2 * H + 1, :])                      # (B, 2*NOM)
        sig = out[:, 0:n_out]
        mu = out[:, NOM:NOM + n_out]

        z2 = x2 * jnp.exp(sig) + mu
        total_lj = total_lj + jnp.sum(sig, axis=-1, keepdims=True)
        if flip:                                             # write transformed half in place
            zbuf[:, :k] = z2
        else:
            zbuf[:, k:] = z2

    z = zbuf[...]
    z_ref[...] = z
    log_pz = (-0.5 * jnp.sum(z * z, axis=-1, keepdims=True)
              - jnp.float32(0.5 * d * math.log(2.0 * math.pi)))
    stats_ref[...] = jnp.concatenate([log_pz, total_lj], axis=-1)   # (B, 2)


# ---------------------------------------------------------------------------
# Wrapper: one pallas_call for the whole flow
# ---------------------------------------------------------------------------
def timeflow_forward(x, packed_params, flips, d, k, hidden, *, batch_block=None):
    B, T = x.shape
    assert T == d
    n_flows, R, C = packed_params.shape
    NOM = max(k, d - k)
    bb = B if batch_block is None else min(batch_block, B)
    assert B % bb == 0, "batch block must divide B for this toy wrapper"
    nb = B // bb

    kernel = functools.partial(
        _timeflow_fused_kernel,
        flips=tuple(bool(f) for f in flips), k=k, d=d, hidden=hidden,
        n_out_max=NOM)

    z, stats = pl.pallas_call(
        kernel,
        grid=(nb,),
        in_specs=[pl.BlockSpec((bb, T), lambda i: (i, 0)),
                  pl.BlockSpec((n_flows, R, C), lambda i: (0, 0, 0))],
        out_specs=[pl.BlockSpec((bb, T), lambda i: (i, 0)),
                   pl.BlockSpec((bb, 2), lambda i: (i, 0))],
        out_shape=(jax.ShapeDtypeStruct((B, T), jnp.float32),
                   jax.ShapeDtypeStruct((B, 2), jnp.float32)),
        scratch_shapes=[pltpu.VMEM((bb, T), jnp.float32)],
        compiler_params=pltpu.CompilerParams(
            dimension_semantics=("parallel",)),   # batch blocks independent (v7x 2 TCs)
    )(x, packed_params)
    return z, stats[:, 0], stats[:, 1]


# ---------------------------------------------------------------------------
# One-time parameter packing (wrapper-side, not in the forward hot path)
# ---------------------------------------------------------------------------
def pack_flow_params(params_list, flips, hidden, d, k):
    """Pack the 8 tensors of every AttentionFilter into one f32 slab per flow.

    Slab rows: [0:2H+1)   block-diagonal [s_wo | m_wo] with bias in row 2H
               2H+1..2H+4 wv_s, bv_s, wv_m, bv_m
               2H+5       [A_s, C_s, A_m, C_m] closed-form score coefficients
    """
    H = hidden
    NOM = max(k, d - k)
    R = 2 * H + 6
    C = max(2 * NOM, H)
    scale = 1.0 / math.sqrt(H)
    slabs = []
    for p, f in zip(params_list, flips):
        n_out = k if f else d - k
        slab = jnp.zeros((R, C), jnp.float32)
        slab = slab.at[0:H, 0:n_out].set(p["s_wo"])
        slab = slab.at[H:2 * H, NOM:NOM + n_out].set(p["m_wo"])
        slab = slab.at[2 * H, 0:n_out].set(p["s_bo"][0])
        slab = slab.at[2 * H, NOM:NOM + n_out].set(p["m_bo"][0])
        slab = slab.at[2 * H + 1, 0:H].set(p["s_wqkv"][2])
        slab = slab.at[2 * H + 2, 0:H].set(p["s_bqkv"][2])
        slab = slab.at[2 * H + 3, 0:H].set(p["m_wqkv"][2])
        slab = slab.at[2 * H + 4, 0:H].set(p["m_bqkv"][2])
        a_s = scale * jnp.dot(p["s_wqkv"][0], p["s_wqkv"][1])
        c_s = scale * jnp.dot(p["s_bqkv"][0], p["s_wqkv"][1])
        a_m = scale * jnp.dot(p["m_wqkv"][0], p["m_wqkv"][1])
        c_m = scale * jnp.dot(p["m_bqkv"][0], p["m_wqkv"][1])
        slab = slab.at[2 * H + 5, 0:4].set(jnp.stack([a_s, c_s, a_m, c_m]))
        slabs.append(slab)
    return jnp.stack(slabs, axis=0)                          # (n_flows, R, C)


# ---------------------------------------------------------------------------
# Pure-JAX reference (explicit attention formulation) for validation
# ---------------------------------------------------------------------------
def _reference_forward(x, params_list, flips, d, k):
    def attn_net(x1, wqkv, bqkv, wo, bo):
        t = x1[:, :, None]
        q = t * wqkv[0][None, None, :] + bqkv[0][None, None, :]
        kk = t * wqkv[1][None, None, :] + bqkv[1][None, None, :]
        v = t * wqkv[2][None, None, :] + bqkv[2][None, None, :]
        scale = 1.0 / math.sqrt(q.shape[-1])
        scores = jnp.einsum("bih,bjh->bij", q, kk) * scale
        p = jax.nn.softmax(scores, axis=-1)
        h = jax.nn.sigmoid(jnp.einsum("bij,bjh->bih", p, v))
        pooled = jnp.mean(h, axis=1)
        return pooled @ wo + bo

    log_jacob = jnp.zeros((x.shape[0],), jnp.float32)
    for p, f in zip(params_list, flips):
        x1, x2 = x[:, :k], x[:, k:]
        if f:
            x1, x2 = x2, x1
        sig = attn_net(x1, p["s_wqkv"], p["s_bqkv"], p["s_wo"], p["s_bo"])
        mu = attn_net(x1, p["m_wqkv"], p["m_bqkv"], p["m_wo"], p["m_bo"])
        z2 = x2 * jnp.exp(sig) + mu
        log_jacob = log_jacob + jnp.sum(sig, axis=-1)
        x = jnp.concatenate([z2, x1], -1) if f else jnp.concatenate([x1, z2], -1)
    log_pz = -0.5 * jnp.sum(x * x, -1) - 0.5 * d * math.log(2.0 * math.pi)
    return x, log_pz, log_jacob


# ---------------------------------------------------------------------------
# Deterministic synthetic parameter initialization (no checkpoint)
# ---------------------------------------------------------------------------
def init_filter_params(key, hidden, n_out, scale=0.1):
    ks = jax.random.split(key, 8)

    def w(kk, shape):
        return (scale * jax.random.normal(kk, shape)).astype(jnp.float32)

    return dict(
        s_wqkv=w(ks[0], (3, hidden)), s_bqkv=w(ks[1], (3, hidden)),
        s_wo=w(ks[2], (hidden, n_out)), s_bo=w(ks[3], (1, n_out)),
        m_wqkv=w(ks[4], (3, hidden)), m_bqkv=w(ks[5], (3, hidden)),
        m_wo=w(ks[6], (hidden, n_out)), m_bo=w(ks[7], (1, n_out)),
    )


# ---------------------------------------------------------------------------
# Main
# ---------------------------------------------------------------------------
if __name__ == "__main__":
    B, T, hidden, n_flows = 8, 8, 32, 2     # TimeFlow(hidden=32, T=8, n_flows=2)
    d = T
    k = T // 2 + 1
    flips = tuple(bool(i % 2) for i in range(n_flows))   # (False, True)

    key = jax.random.PRNGKey(0)
    key, xk = jax.random.split(key)
    x = jax.random.normal(xk, (B, T), dtype=jnp.float32)

    params_list = []
    for f in flips:
        key, pk = jax.random.split(key)
        n_out = k if f else d - k           # flip swaps in/out sizes of the nets
        params_list.append(init_filter_params(pk, hidden, n_out))

    packed = pack_flow_params(params_list, flips, hidden, d, k)

    z, log_pz, log_jacob = timeflow_forward(x, packed, flips, d, k, hidden)
    jax.block_until_ready((z, log_pz, log_jacob))

    assert z.shape == (B, T)
    assert log_pz.shape == (B,)
    assert log_jacob.shape == (B,)

    # validate fused closed-form kernel against the explicit-attention reference
    z_r, lp_r, lj_r = _reference_forward(x, params_list, flips, d, k)
    assert jnp.allclose(z, z_r, atol=1e-3, rtol=1e-3)
    assert jnp.allclose(log_pz, lp_r, atol=1e-3, rtol=1e-3)
    assert jnp.allclose(log_jacob, lj_r, atol=1e-3, rtol=1e-3)

    print("KERNEL_OK")
</pallas_src>

<mosaic_0001>
module attributes {stable_mosaic.version = 11 : i64} {
  func.func @_timeflow_fused_kernel(%arg0: i32, %arg1: memref<8x8xf32, #tpu.memory_space<vmem>>, %arg2: memref<2x70x32xf32, #tpu.memory_space<vmem>>, %arg3: memref<8x8xf32, #tpu.memory_space<vmem>>, %arg4: memref<8x2xf32, #tpu.memory_space<vmem>>, %arg5: memref<8x8xf32, #tpu.memory_space<vmem>>) attributes {dimension_semantics = [#tpu.dimension_semantics<parallel>], iteration_bounds = array<i64: 1>, scalar_prefetch = 0 : i64, scratch_operands = 1 : i64, tpu.core_type = #tpu.core_type<tc>, window_params = [{transform_indices = @transform_0, window_bounds = array<i64: 8, 8>}, {pipeline_mode = #tpu.pipeline_mode<synchronous>, transform_indices = @transform_1, window_bounds = array<i64: 2, 70, 32>}, {transform_indices = @transform_2, window_bounds = array<i64: 8, 8>}, {transform_indices = @transform_3, window_bounds = array<i64: 8, 2>}]} {
    %c0 = arith.constant 0 : index
    %c0_0 = arith.constant 0 : index
    %0 = vector.load %arg1[%c0, %c0_0] : memref<8x8xf32, #tpu.memory_space<vmem>>, vector<8x8xf32>
    %c0_1 = arith.constant 0 : index
    %c0_2 = arith.constant 0 : index
    %1 = vector.load %arg5[%c0_1, %c0_2] : memref<8x8xf32, #tpu.memory_space<vmem>>, vector<8x8xf32>
    tpu.vector_store %arg5[%c0_1, %c0_2], %0 {strides = array<i32>} : memref<8x8xf32, #tpu.memory_space<vmem>>, vector<8x8xf32>,
    %cst = arith.constant 0.000000e+00 : f32
    %2 = vector.broadcast %cst : f32 to vector<8x1xf32>
    %c0_3 = arith.constant 0 : index
    %c0_4 = arith.constant 0 : index
    %c0_5 = arith.constant 0 : index
    %3 = vector.load %arg2[%c0_3, %c0_4, %c0_5] : memref<2x70x32xf32, #tpu.memory_space<vmem>>, vector<1x70x32xf32>
    %4 = vector.shape_cast %3 : vector<1x70x32xf32> to vector<70x32xf32>
    %5 = vector.extract_strided_slice %4 {offsets = [0, 0], sizes = [65, 10], strides = [1, 1]} : vector<70x32xf32> to vector<65x10xf32>
    %6 = vector.extract_strided_slice %4 {offsets = [65, 0], sizes = [1, 32], strides = [1, 1]} : vector<70x32xf32> to vector<1x32xf32>
    %7 = vector.extract_strided_slice %4 {offsets = [66, 0], sizes = [1, 32], strides = [1, 1]} : vector<70x32xf32> to vector<1x32xf32>
    %8 = vector.extract_strided_slice %4 {offsets = [67, 0], sizes = [1, 32], strides = [1, 1]} : vector<70x32xf32> to vector<1x32xf32>
    %9 = vector.extract_strided_slice %4 {offsets = [68, 0], sizes = [1, 32], strides = [1, 1]} : vector<70x32xf32> to vector<1x32xf32>
    %10 = vector.extract_strided_slice %4 {offsets = [69, 0], sizes = [1, 1], strides = [1, 1]} : vector<70x32xf32> to vector<1x1xf32>
    %11 = vector.extract_strided_slice %4 {offsets = [69, 1], sizes = [1, 1], strides = [1, 1]} : vector<70x32xf32> to vector<1x1xf32>
    %12 = vector.extract_strided_slice %4 {offsets = [69, 2], sizes = [1, 1], strides = [1, 1]} : vector<70x32xf32> to vector<1x1xf32>
    %13 = vector.extract_strided_slice %4 {offsets = [69, 3], sizes = [1, 1], strides = [1, 1]} : vector<70x32xf32> to vector<1x1xf32>
    %c0_6 = arith.constant 0 : index
    %c0_7 = arith.constant 0 : index
    %14 = vector.load %arg5[%c0_6, %c0_7] : memref<8x8xf32, #tpu.memory_space<vmem>>, vector<8x5xf32>
    %c0_8 = arith.constant 0 : index
    %c5 = arith.constant 5 : index
    %15 = vector.load %arg5[%c0_8, %c5] : memref<8x8xf32, #tpu.memory_space<vmem>>, vector<8x3xf32>
    %16 = vector.broadcast %10 : vector<1x1xf32> to vector<8x5xf32>
    %17 = arith.mulf %14, %16 : vector<8x5xf32>
    %18 = vector.broadcast %11 : vector<1x1xf32> to vector<8x5xf32>
    %19 = arith.addf %17, %18 : vector<8x5xf32>
    %20 = vector.shape_cast %19 : vector<8x5xf32> to vector<8x5x1xf32>
    %21 = vector.shape_cast %14 : vector<8x5xf32> to vector<8x1x5xf32>
    %22 = vector.broadcast %20 : vector<8x5x1xf32> to vector<8x5x5xf32>
    %23 = vector.broadcast %21 : vector<8x1x5xf32> to vector<8x5x5xf32>
    %24 = arith.mulf %22, %23 : vector<8x5x5xf32>
    %cst_9 = arith.constant dense<0xFF800000> : vector<8x5xf32>
    %25 = vector.multi_reduction <maximumf>, %24, %cst_9 [2] : vector<8x5x5xf32> to vector<8x5xf32>
    %26 = vector.shape_cast %25 : vector<8x5xf32> to vector<8x5x1xf32>
    %27 = vector.broadcast %26 : vector<8x5x1xf32> to vector<8x5x5xf32>
    %28 = arith.subf %24, %27 : vector<8x5x5xf32>
    %29 = math.exp %28 : vector<8x5x5xf32>
    %cst_10 = arith.constant dense<0.000000e+00> : vector<8x5xf32>
    %30 = vector.multi_reduction <add>, %29, %cst_10 [2] : vector<8x5x5xf32> to vector<8x5xf32>
    %31 = vector.shape_cast %30 : vector<8x5xf32> to vector<8x5x1xf32>
    %32 = vector.broadcast %31 : vector<8x5x1xf32> to vector<8x5x5xf32>
    %33 = arith.divf %29, %32 : vector<8x5x5xf32>
    %34 = vector.shape_cast %14 : vector<8x5xf32> to vector<8x1x5xf32>
    %35 = vector.broadcast %34 : vector<8x1x5xf32> to vector<8x5x5xf32>
    %36 = arith.mulf %33, %35 : vector<8x5x5xf32>
    %cst_11 = arith.constant dense<0.000000e+00> : vector<8x5xf32>
    %37 = vector.multi_reduction <add>, %36, %cst_11 [2] : vector<8x5x5xf32> to vector<8x5xf32>
    %38 = vector.shape_cast %37 : vector<8x5xf32> to vector<8x5x1xf32>
    %39 = vector.shape_cast %6 : vector<1x32xf32> to vector<1x1x32xf32>
    %40 = vector.broadcast %38 : vector<8x5x1xf32> to vector<8x5x32xf32>
    %41 = vector.broadcast %39 : vector<1x1x32xf32> to vector<8x5x32xf32>
    %42 = arith.mulf %40, %41 : vector<8x5x32xf32>
    %43 = vector.shape_cast %7 : vector<1x32xf32> to vector<1x1x32xf32>
    %44 = vector.broadcast %43 : vector<1x1x32xf32> to vector<8x5x32xf32>
    %45 = arith.addf %42, %44 : vector<8x5x32xf32>
    %46 = arith.negf %45 : vector<8x5x32xf32>
    %47 = math.exp %46 : vector<8x5x32xf32>
    %cst_12 = arith.constant 1.000000e+00 : f32
    %48 = vector.broadcast %cst_12 : f32 to vector<8x5x32xf32>
    %49 = arith.addf %48, %47 : vector<8x5x32xf32>
    %50 = arith.divf %48, %49 : vector<8x5x32xf32>
    %cst_13 = arith.constant dense<0.000000e+00> : vector<8x32xf32>
    %51 = vector.multi_reduction <add>, %50, %cst_13 [1] : vector<8x5x32xf32> to vector<8x32xf32>
    %cst_14 = arith.constant 5.000000e+00 : f32
    %52 = vector.broadcast %cst_14 : f32 to vector<8x32xf32>
    %53 = arith.divf %51, %52 : vector<8x32xf32>
    %54 = vector.broadcast %12 : vector<1x1xf32> to vector<8x5xf32>
    %55 = arith.mulf %14, %54 : vector<8x5xf32>
    %56 = vector.broadcast %13 : vector<1x1xf32> to vector<8x5xf32>
    %57 = arith.addf %55, %56 : vector<8x5xf32>
    %58 = vector.shape_cast %57 : vector<8x5xf32> to vector<8x5x1xf32>
    %59 = vector.shape_cast %14 : vector<8x5xf32> to vector<8x1x5xf32>
    %60 = vector.broadcast %58 : vector<8x5x1xf32> to vector<8x5x5xf32>
    %61 = vector.broadcast %59 : vector<8x1x5xf32> to vector<8x5x5xf32>
    %62 = arith.mulf %60, %61 : vector<8x5x5xf32>
    %cst_15 = arith.constant dense<0xFF800000> : vector<8x5xf32>
    %63 = vector.multi_reduction <maximumf>, %62, %cst_15 [2] : vector<8x5x5xf32> to vector<8x5xf32>
    %64 = vector.shape_cast %63 : vector<8x5xf32> to vector<8x5x1xf32>
    %65 = vector.broadcast %64 : vector<8x5x1xf32> to vector<8x5x5xf32>
    %66 = arith.subf %62, %65 : vector<8x5x5xf32>
    %67 = math.exp %66 : vector<8x5x5xf32>
    %cst_16 = arith.constant dense<0.000000e+00> : vector<8x5xf32>
    %68 = vector.multi_reduction <add>, %67, %cst_16 [2] : vector<8x5x5xf32> to vector<8x5xf32>
    %69 = vector.shape_cast %68 : vector<8x5xf32> to vector<8x5x1xf32>
    %70 = vector.broadcast %69 : vector<8x5x1xf32> to vector<8x5x5xf32>
    %71 = arith.divf %67, %70 : vector<8x5x5xf32>
    %72 = vector.shape_cast %14 : vector<8x5xf32> to vector<8x1x5xf32>
    %73 = vector.broadcast %72 : vector<8x1x5xf32> to vector<8x5x5xf32>
    %74 = arith.mulf %71, %73 : vector<8x5x5xf32>
    %cst_17 = arith.constant dense<0.000000e+00> : vector<8x5xf32>
    %75 = vector.multi_reduction <add>, %74, %cst_17 [2] : vector<8x5x5xf32> to vector<8x5xf32>
    %76 = vector.shape_cast %75 : vector<8x5xf32> to vector<8x5x1xf32>
    %77 = vector.shape_cast %8 : vector<1x32xf32> to vector<1x1x32xf32>
    %78 = vector.broadcast %76 : vector<8x5x1xf32> to vector<8x5x32xf32>
    %79 = vector.broadcast %77 : vector<1x1x32xf32> to vector<8x5x32xf32>
    %80 = arith.mulf %78, %79 : vector<8x5x32xf32>
    %81 = vector.shape_cast %9 : vector<1x32xf32> to vector<1x1x32xf32>
    %82 = vector.broadcast %81 : vector<1x1x32xf32> to vector<8x5x32xf32>
    %83 = arith.addf %80, %82 : vector<8x5x32xf32>
    %84 = arith.negf %83 : vector<8x5x32xf32>
    %85 = math.exp %84 : vector<8x5x32xf32>
    %cst_18 = arith.constant 1.000000e+00 : f32
    %86 = vector.broadcast %cst_18 : f32 to vector<8x5x32xf32>
    %87 = arith.addf %86, %85 : vector<8x5x32xf32>
    %88 = arith.divf %86, %87 : vector<8x5x32xf32>
    %cst_19 = arith.constant dense<0.000000e+00> : vector<8x32xf32>
    %89 = vector.multi_reduction <add>, %88, %cst_19 [1] : vector<8x5x32xf32> to vector<8x32xf32>
    %cst_20 = arith.constant 5.000000e+00 : f32
    %90 = vector.broadcast %cst_20 : f32 to vector<8x32xf32>
    %91 = arith.divf %89, %90 : vector<8x32xf32>
    %92 = tpu.concatenate %53, %91 in 1 : vector<8x32xf32>, vector<8x32xf32> -> vector<8x64xf32>
    %93 = vector.extract_strided_slice %5 {offsets = [0, 0], sizes = [64, 10], strides = [1, 1]} : vector<65x10xf32> to vector<64x10xf32>
    %cst_21 = arith.constant dense<0.000000e+00> : vector<8x10xf32>
    %94 = tpu.matmul %92, %93, %cst_21 {dimension_numbers = #tpu.dot_dimension_numbers<[1], [0], [0], [1], [0, 0, 1, 1], [], []>} : vector<8x64xf32>, vector<64x10xf32>, vector<8x10xf32> -> vector<8x10xf32>
    %95 = vector.extract_strided_slice %5 {offsets = [64, 0], sizes = [1, 10], strides = [1, 1]} : vector<65x10xf32> to vector<1x10xf32>
    %96 = vector.broadcast %95 : vector<1x10xf32> to vector<8x10xf32>
    %97 = arith.addf %94, %96 : vector<8x10xf32>
    %98 = vector.extract_strided_slice %97 {offsets = [0, 0], sizes = [8, 3], strides = [1, 1]} : vector<8x10xf32> to vector<8x3xf32>
    %99 = vector.extract_strided_slice %97 {offsets = [0, 5], sizes = [8, 3], strides = [1, 1]} : vector<8x10xf32> to vector<8x3xf32>
    %100 = math.exp %98 : vector<8x3xf32>
    %101 = arith.mulf %15, %100 : vector<8x3xf32>
    %102 = arith.addf %101, %99 : vector<8x3xf32>
    %cst_22 = arith.constant dense<0.000000e+00> : vector<8xf32>
    %103 = vector.multi_reduction <add>, %98, %cst_22 [1] : vector<8x3xf32> to vector<8xf32>
    %104 = vector.shape_cast %103 : vector<8xf32> to vector<8x1xf32>
    %105 = arith.addf %2, %104 : vector<8x1xf32>
    %c0_23 = arith.constant 0 : index
    %c5_24 = arith.constant 5 : index
    %106 = vector.load %arg5[%c0_23, %c5_24] : memref<8x8xf32, #tpu.memory_space<vmem>>, vector<8x3xf32>
    tpu.vector_store %arg5[%c0_23, %c5_24], %102 {strides = array<i32>} : memref<8x8xf32, #tpu.memory_space<vmem>>, vector<8x3xf32>,
    %c1 = arith.constant 1 : index
    %c0_25 = arith.constant 0 : index
    %c0_26 = arith.constant 0 : index
    %107 = vector.load %arg2[%c1, %c0_25, %c0_26] : memref<2x70x32xf32, #tpu.memory_space<vmem>>, vector<1x70x32xf32>
    %108 = vector.shape_cast %107 : vector<1x70x32xf32> to vector<70x32xf32>
    %109 = vector.extract_strided_slice %108 {offsets = [0, 0], sizes = [65, 10], strides = [1, 1]} : vector<70x32xf32> to vector<65x10xf32>
    %110 = vector.extract_strided_slice %108 {offsets = [65, 0], sizes = [1, 32], strides = [1, 1]} : vector<70x32xf32> to vector<1x32xf32>
    %111 = vector.extract_strided_slice %108 {offsets = [66, 0], sizes = [1, 32], strides = [1, 1]} : vector<70x32xf32> to vector<1x32xf32>
    %112 = vector.extract_strided_slice %108 {offsets = [67, 0], sizes = [1, 32], strides = [1, 1]} : vector<70x32xf32> to vector<1x32xf32>
    %113 = vector.extract_strided_slice %108 {offsets = [68, 0], sizes = [1, 32], strides = [1, 1]} : vector<70x32xf32> to vector<1x32xf32>
    %114 = vector.extract_strided_slice %108 {offsets = [69, 0], sizes = [1, 1], strides = [1, 1]} : vector<70x32xf32> to vector<1x1xf32>
    %115 = vector.extract_strided_slice %108 {offsets = [69, 1], sizes = [1, 1], strides = [1, 1]} : vector<70x32xf32> to vector<1x1xf32>
    %116 = vector.extract_strided_slice %108 {offsets = [69, 2], sizes = [1, 1], strides = [1, 1]} : vector<70x32xf32> to vector<1x1xf32>
    %117 = vector.extract_strided_slice %108 {offsets = [69, 3], sizes = [1, 1], strides = [1, 1]} : vector<70x32xf32> to vector<1x1xf32>
    %c0_27 = arith.constant 0 : index
    %c5_28 = arith.constant 5 : index
    %118 = vector.load %arg5[%c0_27, %c5_28] : memref<8x8xf32, #tpu.memory_space<vmem>>, vector<8x3xf32>
    %c0_29 = arith.constant 0 : index
    %c0_30 = arith.constant 0 : index
    %119 = vector.load %arg5[%c0_29, %c0_30] : memref<8x8xf32, #tpu.memory_space<vmem>>, vector<8x5xf32>
    %120 = vector.broadcast %114 : vector<1x1xf32> to vector<8x3xf32>
    %121 = arith.mulf %118, %120 : vector<8x3xf32>
    %122 = vector.broadcast %115 : vector<1x1xf32> to vector<8x3xf32>
    %123 = arith.addf %121, %122 : vector<8x3xf32>
    %124 = vector.shape_cast %123 : vector<8x3xf32> to vector<8x3x1xf32>
    %125 = vector.shape_cast %118 : vector<8x3xf32> to vector<8x1x3xf32>
    %126 = vector.broadcast %124 : vector<8x3x1xf32> to vector<8x3x3xf32>
    %127 = vector.broadcast %125 : vector<8x1x3xf32> to vector<8x3x3xf32>
    %128 = arith.mulf %126, %127 : vector<8x3x3xf32>
    %cst_31 = arith.constant dense<0xFF800000> : vector<8x3xf32>
    %129 = vector.multi_reduction <maximumf>, %128, %cst_31 [2] : vector<8x3x3xf32> to vector<8x3xf32>
    %130 = vector.shape_cast %129 : vector<8x3xf32> to vector<8x3x1xf32>
    %131 = vector.broadcast %130 : vector<8x3x1xf32> to vector<8x3x3xf32>
    %132 = arith.subf %128, %131 : vector<8x3x3xf32>
    %133 = math.exp %132 : vector<8x3x3xf32>
    %cst_32 = arith.constant dense<0.000000e+00> : vector<8x3xf32>
    %134 = vector.multi_reduction <add>, %133, %cst_32 [2] : vector<8x3x3xf32> to vector<8x3xf32>
    %135 = vector.shape_cast %134 : vector<8x3xf32> to vector<8x3x1xf32>
    %136 = vector.broadcast %135 : vector<8x3x1xf32> to vector<8x3x3xf32>
    %137 = arith.divf %133, %136 : vector<8x3x3xf32>
    %138 = vector.shape_cast %118 : vector<8x3xf32> to vector<8x1x3xf32>
    %139 = vector.broadcast %138 : vector<8x1x3xf32> to vector<8x3x3xf32>
    %140 = arith.mulf %137, %139 : vector<8x3x3xf32>
    %cst_33 = arith.constant dense<0.000000e+00> : vector<8x3xf32>
    %141 = vector.multi_reduction <add>, %140, %cst_33 [2] : vector<8x3x3xf32> to vector<8x3xf32>
    %142 = vector.shape_cast %141 : vector<8x3xf32> to vector<8x3x1xf32>
    %143 = vector.shape_cast %110 : vector<1x32xf32> to vector<1x1x32xf32>
    %144 = vector.broadcast %142 : vector<8x3x1xf32> to vector<8x3x32xf32>
    %145 = vector.broadcast %143 : vector<1x1x32xf32> to vector<8x3x32xf32>
    %146 = arith.mulf %144, %145 : vector<8x3x32xf32>
    %147 = vector.shape_cast %111 : vector<1x32xf32> to vector<1x1x32xf32>
    %148 = vector.broadcast %147 : vector<1x1x32xf32> to vector<8x3x32xf32>
    %149 = arith.addf %146, %148 : vector<8x3x32xf32>
    %150 = arith.negf %149 : vector<8x3x32xf32>
    %151 = math.exp %150 : vector<8x3x32xf32>
    %cst_34 = arith.constant 1.000000e+00 : f32
    %152 = vector.broadcast %cst_34 : f32 to vector<8x3x32xf32>
    %153 = arith.addf %152, %151 : vector<8x3x32xf32>
    %154 = arith.divf %152, %153 : vector<8x3x32xf32>
    %cst_35 = arith.constant dense<0.000000e+00> : vector<8x32xf32>
    %155 = vector.multi_reduction <add>, %154, %cst_35 [1] : vector<8x3x32xf32> to vector<8x32xf32>
    %cst_36 = arith.constant 3.000000e+00 : f32
    %156 = vector.broadcast %cst_36 : f32 to vector<8x32xf32>
    %157 = arith.divf %155, %156 : vector<8x32xf32>
    %158 = vector.broadcast %116 : vector<1x1xf32> to vector<8x3xf32>
    %159 = arith.mulf %118, %158 : vector<8x3xf32>
    %160 = vector.broadcast %117 : vector<1x1xf32> to vector<8x3xf32>
    %161 = arith.addf %159, %160 : vector<8x3xf32>
    %162 = vector.shape_cast %161 : vector<8x3xf32> to vector<8x3x1xf32>
    %163 = vector.shape_cast %118 : vector<8x3xf32> to vector<8x1x3xf32>
    %164 = vector.broadcast %162 : vector<8x3x1xf32> to vector<8x3x3xf32>
    %165 = vector.broadcast %163 : vector<8x1x3xf32> to vector<8x3x3xf32>
    %166 = arith.mulf %164, %165 : vector<8x3x3xf32>
    %cst_37 = arith.constant dense<0xFF800000> : vector<8x3xf32>
    %167 = vector.multi_reduction <maximumf>, %166, %cst_37 [2] : vector<8x3x3xf32> to vector<8x3xf32>
    %168 = vector.shape_cast %167 : vector<8x3xf32> to vector<8x3x1xf32>
    %169 = vector.broadcast %168 : vector<8x3x1xf32> to vector<8x3x3xf32>
    %170 = arith.subf %166, %169 : vector<8x3x3xf32>
    %171 = math.exp %170 : vector<8x3x3xf32>
    %cst_38 = arith.constant dense<0.000000e+00> : vector<8x3xf32>
    %172 = vector.multi_reduction <add>, %171, %cst_38 [2] : vector<8x3x3xf32> to vector<8x3xf32>
    %173 = vector.shape_cast %172 : vector<8x3xf32> to vector<8x3x1xf32>
    %174 = vector.broadcast %173 : vector<8x3x1xf32> to vector<8x3x3xf32>
    %175 = arith.divf %171, %174 : vector<8x3x3xf32>
    %176 = vector.shape_cast %118 : vector<8x3xf32> to vector<8x1x3xf32>
    %177 = vector.broadcast %176 : vector<8x1x3xf32> to vector<8x3x3xf32>
    %178 = arith.mulf %175, %177 : vector<8x3x3xf32>
    %cst_39 = arith.constant dense<0.000000e+00> : vector<8x3xf32>
    %179 = vector.multi_reduction <add>, %178, %cst_39 [2] : vector<8x3x3xf32> to vector<8x3xf32>
    %180 = vector.shape_cast %179 : vector<8x3xf32> to vector<8x3x1xf32>
    %181 = vector.shape_cast %112 : vector<1x32xf32> to vector<1x1x32xf32>
    %182 = vector.broadcast %180 : vector<8x3x1xf32> to vector<8x3x32xf32>
    %183 = vector.broadcast %181 : vector<1x1x32xf32> to vector<8x3x32xf32>
    %184 = arith.mulf %182, %183 : vector<8x3x32xf32>
    %185 = vector.shape_cast %113 : vector<1x32xf32> to vector<1x1x32xf32>
    %186 = vector.broadcast %185 : vector<1x1x32xf32> to vector<8x3x32xf32>
    %187 = arith.addf %184, %186 : vector<8x3x32xf32>
    %188 = arith.negf %187 : vector<8x3x32xf32>
    %189 = math.exp %188 : vector<8x3x32xf32>
    %cst_40 = arith.constant 1.000000e+00 : f32
    %190 = vector.broadcast %cst_40 : f32 to vector<8x3x32xf32>
    %191 = arith.addf %190, %189 : vector<8x3x32xf32>
    %192 = arith.divf %190, %191 : vector<8x3x32xf32>
    %cst_41 = arith.constant dense<0.000000e+00> : vector<8x32xf32>
    %193 = vector.multi_reduction <add>, %192, %cst_41 [1] : vector<8x3x32xf32> to vector<8x32xf32>
    %cst_42 = arith.constant 3.000000e+00 : f32
    %194 = vector.broadcast %cst_42 : f32 to vector<8x32xf32>
    %195 = arith.divf %193, %194 : vector<8x32xf32>
    %196 = tpu.concatenate %157, %195 in 1 : vector<8x32xf32>, vector<8x32xf32> -> vector<8x64xf32>
    %197 = vector.extract_strided_slice %109 {offsets = [0, 0], sizes = [64, 10], strides = [1, 1]} : vector<65x10xf32> to vector<64x10xf32>
    %cst_43 = arith.constant dense<0.000000e+00> : vector<8x10xf32>
    %198 = tpu.matmul %196, %197, %cst_43 {dimension_numbers = #tpu.dot_dimension_numbers<[1], [0], [0], [1], [0, 0, 1, 1], [], []>} : vector<8x64xf32>, vector<64x10xf32>, vector<8x10xf32> -> vector<8x10xf32>
    %199 = vector.extract_strided_slice %109 {offsets = [64, 0], sizes = [1, 10], strides = [1, 1]} : vector<65x10xf32> to vector<1x10xf32>
    %200 = vector.broadcast %199 : vector<1x10xf32> to vector<8x10xf32>
    %201 = arith.addf %198, %200 : vector<8x10xf32>
    %202 = vector.extract_strided_slice %201 {offsets = [0, 0], sizes = [8, 5], strides = [1, 1]} : vector<8x10xf32> to vector<8x5xf32>
    %203 = vector.extract_strided_slice %201 {offsets = [0, 5], sizes = [8, 5], strides = [1, 1]} : vector<8x10xf32> to vector<8x5xf32>
    %204 = math.exp %202 : vector<8x5xf32>
    %205 = arith.mulf %119, %204 : vector<8x5xf32>
    %206 = arith.addf %205, %203 : vector<8x5xf32>
    %cst_44 = arith.constant dense<0.000000e+00> : vector<8xf32>
    %207 = vector.multi_reduction <add>, %202, %cst_44 [1] : vector<8x5xf32> to vector<8xf32>
    %208 = vector.shape_cast %207 : vector<8xf32> to vector<8x1xf32>
    %209 = arith.addf %105, %208 : vector<8x1xf32>
    %c0_45 = arith.constant 0 : index
    %c0_46 = arith.constant 0 : index
    %210 = vector.load %arg5[%c0_45, %c0_46] : memref<8x8xf32, #tpu.memory_space<vmem>>, vector<8x5xf32>
    tpu.vector_store %arg5[%c0_45, %c0_46], %206 {strides = array<i32>} : memref<8x8xf32, #tpu.memory_space<vmem>>, vector<8x5xf32>,
    %c0_47 = arith.constant 0 : index
    %c0_48 = arith.constant 0 : index
    %211 = vector.load %arg5[%c0_47, %c0_48] : memref<8x8xf32, #tpu.memory_space<vmem>>, vector<8x8xf32>
    %c0_49 = arith.constant 0 : index
    %c0_50 = arith.constant 0 : index
    %212 = vector.load %arg3[%c0_49, %c0_50] : memref<8x8xf32, #tpu.memory_space<vmem>>, vector<8x8xf32>
    tpu.vector_store %arg3[%c0_49, %c0_50], %211 {strides = array<i32>} : memref<8x8xf32, #tpu.memory_space<vmem>>, vector<8x8xf32>,
    %213 = arith.mulf %211, %211 : vector<8x8xf32>
    %cst_51 = arith.constant dense<0.000000e+00> : vector<8xf32>
    %214 = vector.multi_reduction <add>, %213, %cst_51 [1] : vector<8x8xf32> to vector<8xf32>
    %215 = vector.shape_cast %214 : vector<8xf32> to vector<8x1xf32>
    %cst_52 = arith.constant -5.000000e-01 : f32
    %216 = vector.broadcast %cst_52 : f32 to vector<8x1xf32>
    %217 = arith.mulf %216, %215 : vector<8x1xf32>
    %cst_53 = arith.constant 7.35150814 : f32
    %218 = vector.broadcast %cst_53 : f32 to vector<8x1xf32>
    %219 = arith.subf %217, %218 : vector<8x1xf32>
    %220 = tpu.concatenate %219, %209 in 1 : vector<8x1xf32>, vector<8x1xf32> -> vector<8x2xf32>
    %c0_54 = arith.constant 0 : index
    %c0_55 = arith.constant 0 : index
    %221 = vector.load %arg4[%c0_54, %c0_55] : memref<8x2xf32, #tpu.memory_space<vmem>>, vector<8x2xf32>
    tpu.vector_store %arg4[%c0_54, %c0_55], %220 {strides = array<i32>} : memref<8x2xf32, #tpu.memory_space<vmem>>, vector<8x2xf32>,
    return
  }
  func.func @transform_0(%arg0: i32) -> (i32, i32) {
    %c0_i32 = arith.constant 0 : i32
    %c0_i32_0 = arith.constant 0 : i32
    return %arg0, %c0_i32 : i32, i32
  }
  func.func @transform_1(%arg0: i32) -> (i32, i32, i32) {
    %c0_i32 = arith.constant 0 : i32
    %c0_i32_0 = arith.constant 0 : i32
    %c0_i32_1 = arith.constant 0 : i32
    %c0_i32_2 = arith.constant 0 : i32
    return %c0_i32, %c0_i32_0, %c0_i32_1 : i32, i32, i32
  }
  func.func @transform_2(%arg0: i32) -> (i32, i32) {
    %c0_i32 = arith.constant 0 : i32
    %c0_i32_0 = arith.constant 0 : i32
    return %arg0, %c0_i32 : i32, i32
  }
  func.func @transform_3(%arg0: i32) -> (i32, i32) {
    %c0_i32 = arith.constant 0 : i32
    %c0_i32_0 = arith.constant 0 : i32
    return %arg0, %c0_i32 : i32, i32
  }
}

</mosaic_0001>

<llo_original>
// kernel: tpu_custom_call.1
$region0: #{tpu_custom_call.1}
  #allocation0 [shape = 'u32[]', space=smem, size = 0x4, offset = 0x4, fixed_abs, tag = 'smem constant byte address 0x4 - core index']
  #allocation1 [shape = 'u32[144,128]{1,0:T(1,128)}', space=vmem, size = 0x12000, scoped, tag = 'internal scratch']
  #allocation2 [shape = 'f32[8,8]{1,0:T(8,128)}', space=vmem, size = 0x1000, scoped, tag = 'scratch operand']
  %s0 = inlined_call_operand.vmem [shape: f32[8,8], index: 0, kind: input, shape index: {}]
  %s1 = inlined_call_operand.vmem [shape: f32[2,70,32], index: 1, kind: input, shape index: {}]
  %s2 = inlined_call_operand.hbm [shape: f32[8,8], index: 2, kind: output, shape index: {0}]
  %s3 = inlined_call_operand.vmem [shape: f32[8,2], index: 3, kind: output, shape index: {1}]
  %4 = xla_tuple %s2, %s3
  %s5 = sld [smem:[#allocation0]]
  $region26: #{tpu_custom_call.1} parent=0
    _
  %s7 = ssub.s32 1, %s5
  %s8 = scalar_select 0, %s7, %s5
  $region1: #{tpu_custom_call.1} parent=0
    #allocation3 [shape = 'u8[4096]{0}', space=vmem, size = 0x1000, scoped, tag = 'output window, operand 0, single buffered']
    #allocation4 [shape = 's32[1]{0}', space=sflag, size = 0x4, scoped, tag = 'scoped memory for tpu_custom_call.1']
    %9 = vsyncpa [#allocation4], 0
    // Predicated region
    $region2: #{tpu_custom_call.1} parent=1 // pred_check
      _
    $region3: #{tpu_custom_call.1} parent=1 // pred_check_branch
      %11 = sbr.rel (0) target = $region5
    $region4: #{tpu_custom_call.1} parent=1 // pred_region
      _
    $region5: #{tpu_custom_call.1} parent=1 // pred_fallthru
      _
    // Predicated region
    $region6: #{tpu_custom_call.1} parent=1 // pred_check
      _
    $region7: #{tpu_custom_call.1} parent=1 // pred_check_branch
      %13 = sbr.rel (0) target = $region9
    $region8: #{tpu_custom_call.1} parent=1 // pred_region
      _
    $region9: #{tpu_custom_call.1} parent=1 // pred_fallthru
      _
    %v14 = vld [vmem:[%s0] sm:$0xff]
    %vm15 = vcmask 64512
    %16 = vst.msk [vmem:[#allocation2] sm:$0xff] %vm15, %v14
    %v17 = vld [vmem:[%s1] sm:$0xff]
    %v18 = vld [vmem:[%s1 + $0x8] sm:$0xff]
    %v19 = vld [vmem:[%s1 + $0x10] sm:$0xff]
    %v20 = vld [vmem:[%s1 + $0x18] sm:$0xff]
    %v21 = vld [vmem:[%s1 + $0x20] sm:$0xff]
    %v22 = vld [vmem:[%s1 + $0x28] sm:$0xff]
    %v23 = vld [vmem:[%s1 + $0x30] sm:$0xff]
    %v24 = vld [vmem:[%s1 + $0x38] sm:$0xff]
    %v25 = vld [vmem:[%s1 + $0x40] sm:$0x3f]
    %v26 = vld [vmem:[#allocation2] sm:$0xff]
    %v28 = vrot.slane %v25, 5
    %s29 = vtos %v28
    %v30 = vstv %s29
    %v32 = vmul.f32 %v26, %v30
    %33 = vrot.lane.b32.xlu0 %v28, 127
    %v34 = vpop.permute.xlu0 %33
    %s35 = vtos %v34
    %v36 = vstv %s35
    %v38 = vadd.f32 %v32, %v36
    %v39 = vlaneseq
    %v40 = vshrl.u32 %v39, 7
    %v41 = vsub.s32 0, %v40
    %v42 = vrot.slane %v38, %v41
    %44 = vbcast.lane.b32.xlu0 %v42, 256
    %v45 = vpop.permute.xlu0 %44
    %v46 = vlaneseq
    %v47 = vshrl.u32 %v46, 7
    %v48 = vsub.s32 1, %v47
    %v49 = vrot.slane %v38, %v48
    %51 = vbcast.lane.b32.xlu0 %v49, 256
    %v52 = vpop.permute.xlu0 %51
    %v53 = vlaneseq
    %v54 = vshrl.u32 %v53, 7
    %v55 = vsub.s32 2, %v54
    %v56 = vrot.slane %v38, %v55
    %58 = vbcast.lane.b32.xlu0 %v56, 256
    %v59 = vpop.permute.xlu0 %58
    %v60 = vlaneseq
    %v61 = vshrl.u32 %v60, 7
    %v62 = vsub.s32 3, %v61
    %v63 = vrot.slane %v38, %v62
    %65 = vbcast.lane.b32.xlu0 %v63, 256
    %v66 = vpop.permute.xlu0 %65
    %v67 = vlaneseq
    %v68 = vshrl.u32 %v67, 7
    %v69 = vsub.s32 4, %v68
    %v70 = vrot.slane %v38, %v69
    %72 = vbcast.lane.b32.xlu0 %v70, 256
    %v73 = vpop.permute.xlu0 %72
    %v74 = vlaneseq
    %v75 = vshrl.u32 %v74, 7
    %v76 = vsub.s32 5, %v75
    %v77 = vrot.slane %v38, %v76
    %79 = vbcast.lane.b32.xlu0 %v77, 256
    %v80 = vpop.permute.xlu0 %79
    %v81 = vlaneseq
    %v82 = vshrl.u32 %v81, 7
    %v83 = vsub.s32 6, %v82
    %v84 = vrot.slane %v38, %v83
    %86 = vbcast.lane.b32.xlu0 %v84, 256
    %v87 = vpop.permute.xlu0 %86
    %v88 = vlaneseq
    %v89 = vshrl.u32 %v88, 7
    %v90 = vsub.s32 7, %v89
    %v91 = vrot.slane %v38, %v90
    %93 = vbcast.lane.b32.xlu0 %v91, 256
    %v94 = vpop.permute.xlu0 %93
    %v96 = vcombine.high %v26, %v26
    %v98 = vunpack.c.l.s4 1966171168
    %v99 = vunpack.c.0.s8 %v98
    %v100 = vlaneseq
    %v101 = vshrl.u32 %v100, 7
    %v102 = vsub.s32 %v99, %v101
    %v103 = vrot.slane %v26, %v102
    %v105 = vunpack.c.l.s4 1966171168
    %v106 = vunpack.c.0.s8 %v105
    %v107 = vlaneseq
    %v108 = vshrl.u32 %v107, 7
    %v109 = vsub.s32 %v106, %v108
    %v110 = vrot.slane %v96, %v109
    %v111 = vcombine.high %v103, %v103
    %v112 = vcombine.high %v110, %v110
    %v114 = vunpack.c.l.s4 1966171168
    %v115 = vunpack.c.0.s8 %v114
    %v116 = vlaneseq
    %v117 = vshrl.u32 %v116, 7
    %v118 = vsub.s32 %v115, %v117
    %v119 = vrot.slane %v103, %v118
    %v121 = vunpack.c.l.s4 1966171168
    %v122 = vunpack.c.0.s8 %v121
    %v123 = vlaneseq
    %v124 = vshrl.u32 %v123, 7
    %v125 = vsub.s32 %v122, %v124
    %v126 = vrot.slane %v110, %v125
    %v128 = vunpack.c.l.s4 1966171168
    %v129 = vunpack.c.0.s8 %v128
    %v130 = vlaneseq
    %v131 = vshrl.u32 %v130, 7
    %v132 = vsub.s32 %v129, %v131
    %v133 = vrot.slane %v111, %v132
    %v135 = vunpack.c.l.s4 1966171168
    %v136 = vunpack.c.0.s8 %v135
    %v137 = vlaneseq
    %v138 = vshrl.u32 %v137, 7
    %v139 = vsub.s32 %v136, %v138
    %v140 = vrot.slane %v112, %v139
    %v141 = vcombine.high %v119, %v119
    %v142 = vcombine.high %v126, %v126
    %v143 = vcombine.high %v133, %v133
    %v144 = vcombine.high %v140, %v140
    %v145 = vlaneseq
    %v146 = vshrl.u32 %v145, 7
    %v147 = vsub.s32 0, %v146
    %v148 = vrot.slane %v119, %v147
    %v149 = vlaneseq
    %v150 = vshrl.u32 %v149, 7
    %v151 = vsub.s32 0, %v150
    %v152 = vrot.slane %v133, %v151
    %v153 = vlaneseq
    %v154 = vshrl.u32 %v153, 7
    %v155 = vsub.s32 0, %v154
    %v156 = vrot.slane %v141, %v155
    %v157 = vlaneseq
    %v158 = vshrl.u32 %v157, 7
    %v159 = vsub.s32 0, %v158
    %v160 = vrot.slane %v143, %v159
    %v161 = vlaneseq
    %v162 = vshrl.u32 %v161, 7
    %v163 = vsub.s32 0, %v162
    %v164 = vrot.slane %v126, %v163
    %v165 = vlaneseq
    %v166 = vshrl.u32 %v165, 7
    %v167 = vsub.s32 0, %v166
    %v168 = vrot.slane %v140, %v167
    %v169 = vlaneseq
    %v170 = vshrl.u32 %v169, 7
    %v171 = vsub.s32 0, %v170
    %v172 = vrot.slane %v142, %v171
    %v173 = vlaneseq
    %v174 = vshrl.u32 %v173, 7
    %v175 = vsub.s32 0, %v174
    %v176 = vrot.slane %v144, %v175
    %v185 = vmul.f32 %v45, %v148
    %v186 = vmul.f32 %v52, %v152
    %v187 = vmul.f32 %v59, %v156
    %v188 = vmul.f32 %v66, %v160
    %v189 = vmul.f32 %v73, %v164
    %v190 = vmul.f32 %v80, %v168
    %v191 = vmul.f32 %v87, %v172
    %v192 = vmul.f32 %v94, %v176
    %vm193 = vcmask 36864
    %v194 = vsel %vm193, %v185, -inf
    %195 = vmax.xlane.f32.xlu0 %v194
    %v196 = vpop.xlane.xlu0 %195
    %v197 = vsel %vm193, %v186, -inf
    %198 = vmax.xlane.f32.xlu0 %v197
    %v199 = vpop.xlane.xlu0 %198
    %v200 = vsel %vm193, %v187, -inf
    %201 = vmax.xlane.f32.xlu0 %v200
    %v202 = vpop.xlane.xlu0 %201
    %v203 = vsel %vm193, %v188, -inf
    %204 = vmax.xlane.f32.xlu0 %v203
    %v205 = vpop.xlane.xlu0 %204
    %v206 = vsel %vm193, %v189, -inf
    %207 = vmax.xlane.f32.xlu0 %v206
    %v208 = vpop.xlane.xlu0 %207
    %v209 = vsel %vm193, %v190, -inf
    %210 = vmax.xlane.f32.xlu0 %v209
    %v211 = vpop.xlane.xlu0 %210
    %v212 = vsel %vm193, %v191, -inf
    %213 = vmax.xlane.f32.xlu0 %v212
    %v214 = vpop.xlane.xlu0 %213
    %v215 = vsel %vm193, %v192, -inf
    %216 = vmax.xlane.f32.xlu0 %v215
    %v217 = vpop.xlane.xlu0 %216
    %v218 = vsub.f32 %v185, %v196
    %v219 = vsub.f32 %v186, %v199
    %v220 = vsub.f32 %v187, %v202
    %v221 = vsub.f32 %v188, %v205
    %v222 = vsub.f32 %v189, %v208
    %v223 = vsub.f32 %v190, %v211
    %v224 = vsub.f32 %v191, %v214
    %v225 = vsub.f32 %v192, %v217
    %v226 = vmul.f32 %v218, 1.442695
    %v227 = vpow.pop %v226
    %v228 = vmul.f32 %v219, 1.442695
    %v229 = vpow.pop %v228
    %v230 = vmul.f32 %v220, 1.442695
    %v231 = vpow.pop %v230
    %v232 = vmul.f32 %v221, 1.442695
    %v233 = vpow.pop %v232
    %v234 = vmul.f32 %v222, 1.442695
    %v235 = vpow.pop %v234
    %v236 = vmul.f32 %v223, 1.442695
    %v237 = vpow.pop %v236
    %v238 = vmul.f32 %v224, 1.442695
    %v239 = vpow.pop %v238
    %v240 = vmul.f32 %v225, 1.442695
    %v241 = vpow.pop %v240
    %v242 = vsel %vm193, %v227, 0.0
    %243 = vadd.xlane.f32.xlu0 %v242
    %v244 = vpop.xlane.xlu0 %243
    %v245 = vsel %vm193, %v229, 0.0
    %246 = vadd.xlane.f32.xlu0 %v245
    %v247 = vpop.xlane.xlu0 %246
    %v248 = vsel %vm193, %v231, 0.0
    %249 = vadd.xlane.f32.xlu0 %v248
    %v250 = vpop.xlane.xlu0 %249
    %v251 = vsel %vm193, %v233, 0.0
    %252 = vadd.xlane.f32.xlu0 %v251
    %v253 = vpop.xlane.xlu0 %252
    %v254 = vsel %vm193, %v235, 0.0
    %255 = vadd.xlane.f32.xlu0 %v254
    %v256 = vpop.xlane.xlu0 %255
    %v257 = vsel %vm193, %v237, 0.0
    %258 = vadd.xlane.f32.xlu0 %v257
    %v259 = vpop.xlane.xlu0 %258
    %v260 = vsel %vm193, %v239, 0.0
    %261 = vadd.xlane.f32.xlu0 %v260
    %v262 = vpop.xlane.xlu0 %261
    %v263 = vsel %vm193, %v241, 0.0
    %264 = vadd.xlane.f32.xlu0 %v263
    %v265 = vpop.xlane.xlu0 %264
    %v266 = vrcp.pop %v244
    %v267 = vmul.f32 %v227, %v266
    %v268 = vrcp.pop %v247
    %v269 = vmul.f32 %v229, %v268
    %v270 = vrcp.pop %v250
    %v271 = vmul.f32 %v231, %v270
    %v272 = vrcp.pop %v253
    %v273 = vmul.f32 %v233, %v272
    %v274 = vrcp.pop %v256
    %v275 = vmul.f32 %v235, %v274
    %v276 = vrcp.pop %v259
    %v277 = vmul.f32 %v237, %v276
    %v278 = vrcp.pop %v262
    %v279 = vmul.f32 %v239, %v278
    %v280 = vrcp.pop %v265
    %v281 = vmul.f32 %v241, %v280
    %v282 = vmul.f32 %v267, %v148
    %v283 = vmul.f32 %v269, %v152
    %v284 = vmul.f32 %v271, %v156
    %v285 = vmul.f32 %v273, %v160
    %v286 = vmul.f32 %v275, %v164
    %v287 = vmul.f32 %v277, %v168
    %v288 = vmul.f32 %v279, %v172
    %v289 = vmul.f32 %v281, %v176
    %v290 = vsel %vm193, %v282, 0.0
    %291 = vadd.xlane.f32.xlu0 %v290
    %v292 = vpop.xlane.xlu0 %291
    %v293 = vsel %vm193, %v283, 0.0
    %294 = vadd.xlane.f32.xlu0 %v293
    %v295 = vpop.xlane.xlu0 %294
    %v296 = vsel %vm193, %v284, 0.0
    %297 = vadd.xlane.f32.xlu0 %v296
    %v298 = vpop.xlane.xlu0 %297
    %v299 = vsel %vm193, %v285, 0.0
    %300 = vadd.xlane.f32.xlu0 %v299
    %v301 = vpop.xlane.xlu0 %300
    %v302 = vsel %vm193, %v286, 0.0
    %303 = vadd.xlane.f32.xlu0 %v302
    %v304 = vpop.xlane.xlu0 %303
    %v305 = vsel %vm193, %v287, 0.0
    %306 = vadd.xlane.f32.xlu0 %v305
    %v307 = vpop.xlane.xlu0 %306
    %v308 = vsel %vm193, %v288, 0.0
    %309 = vadd.xlane.f32.xlu0 %v308
    %v310 = vpop.xlane.xlu0 %309
    %v311 = vsel %vm193, %v289, 0.0
    %312 = vadd.xlane.f32.xlu0 %v311
    %v313 = vpop.xlane.xlu0 %312
    %v314 = vlaneseq
    %v315 = vshrl.u32 %v314, 7
    %v316 = vsub.s32 1, %v315
    %v317 = vrot.slane %v25, %v316
    %v318 = vmul.f32 %v292, %v317
    %v319 = vmul.f32 %v295, %v317
    %v320 = vmul.f32 %v298, %v317
    %v321 = vmul.f32 %v301, %v317
    %v322 = vmul.f32 %v304, %v317
    %v323 = vmul.f32 %v307, %v317
    %v324 = vmul.f32 %v310, %v317
    %v325 = vmul.f32 %v313, %v317
    %v326 = vlaneseq
    %v327 = vshrl.u32 %v326, 7
    %v328 = vsub.s32 2, %v327
    %v329 = vrot.slane %v25, %v328
    %v330 = vadd.f32 %v318, %v329
    %v331 = vadd.f32 %v319, %v329
    %v332 = vadd.f32 %v320, %v329
    %v333 = vadd.f32 %v321, %v329
    %v334 = vadd.f32 %v322, %v329
    %v335 = vadd.f32 %v323, %v329
    %v336 = vadd.f32 %v324, %v329
    %v337 = vadd.f32 %v325, %v329
    %v338 = vxor.u32 %v330, 2147483648
    %v339 = vxor.u32 %v331, 2147483648
    %v340 = vxor.u32 %v332, 2147483648
    %v341 = vxor.u32 %v333, 2147483648
    %v342 = vxor.u32 %v334, 2147483648
    %v343 = vxor.u32 %v335, 2147483648
    %v344 = vxor.u32 %v336, 2147483648
    %v345 = vxor.u32 %v337, 2147483648
    %v346 = vmul.f32 %v338, 1.442695
    %v347 = vpow.pop %v346
    %v348 = vmul.f32 %v339, 1.442695
    %v349 = vpow.pop %v348
    %v350 = vmul.f32 %v340, 1.442695
    %v351 = vpow.pop %v350
    %v352 = vmul.f32 %v341, 1.442695
    %v353 = vpow.pop %v352
    %v354 = vmul.f32 %v342, 1.442695
    %v355 = vpow.pop %v354
    %v356 = vmul.f32 %v343, 1.442695
    %v357 = vpow.pop %v356
    %v358 = vmul.f32 %v344, 1.442695
    %v359 = vpow.pop %v358
    %v360 = vmul.f32 %v345, 1.442695
    %v361 = vpow.pop %v360
    %v362 = vadd.f32 %v347, 1.0
    %v363 = vadd.f32 %v349, 1.0
    %v364 = vadd.f32 %v351, 1.0
    %v365 = vadd.f32 %v353, 1.0
    %v366 = vadd.f32 %v355, 1.0
    %v367 = vadd.f32 %v357, 1.0
    %v368 = vadd.f32 %v359, 1.0
    %v369 = vadd.f32 %v361, 1.0
    %v370 = vrcp.pop %v362
    %v371 = vmul.f32 1.0, %v370
    %v372 = vrcp.pop %v363
    %v373 = vmul.f32 1.0, %v372
    %v374 = vrcp.pop %v364
    %v375 = vmul.f32 1.0, %v374
    %v376 = vrcp.pop %v365
    %v377 = vmul.f32 1.0, %v376
    %v378 = vrcp.pop %v366
    %v379 = vmul.f32 1.0, %v378
    %v380 = vrcp.pop %v367
    %v381 = vmul.f32 1.0, %v380
    %v382 = vrcp.pop %v368
    %v383 = vmul.f32 1.0, %v382
    %v384 = vrcp.pop %v369
    %v385 = vmul.f32 1.0, %v384
    %vm386 = vcmask 258048
    %v387 = vsel %vm386, %v371, 0.0
    %v388 = vrot.slane %v387, 4
    %v389 = vadd.f32 %v387, %v388
    %v390 = vrot.slane %v389, 2
    %v391 = vadd.f32 %v389, %v390
    %v392 = vrot.slane %v391, 1
    %v393 = vadd.f32 %v391, %v392
    %v394 = vsel %vm386, %v373, 0.0
    %v395 = vrot.slane %v394, 4
    %v396 = vadd.f32 %v394, %v395
    %v397 = vrot.slane %v396, 2
    %v398 = vadd.f32 %v396, %v397
    %v399 = vrot.slane %v398, 1
    %v400 = vadd.f32 %v398, %v399
    %v401 = vsel %vm386, %v375, 0.0
    %v402 = vrot.slane %v401, 4
    %v403 = vadd.f32 %v401, %v402
    %v404 = vrot.slane %v403, 2
    %v405 = vadd.f32 %v403, %v404
    %v406 = vrot.slane %v405, 1
    %v407 = vadd.f32 %v405, %v406
    %v408 = vsel %vm386, %v377, 0.0
    %v409 = vrot.slane %v408, 4
    %v410 = vadd.f32 %v408, %v409
    %v411 = vrot.slane %v410, 2
    %v412 = vadd.f32 %v410, %v411
    %v413 = vrot.slane %v412, 1
    %v414 = vadd.f32 %v412, %v413
    %v415 = vsel %vm386, %v379, 0.0
    %v416 = vrot.slane %v415, 4
    %v417 = vadd.f32 %v415, %v416
    %v418 = vrot.slane %v417, 2
    %v419 = vadd.f32 %v417, %v418
    %v420 = vrot.slane %v419, 1
    %v421 = vadd.f32 %v419, %v420
    %v422 = vsel %vm386, %v381, 0.0
    %v423 = vrot.slane %v422, 4
    %v424 = vadd.f32 %v422, %v423
    %v425 = vrot.slane %v424, 2
    %v426 = vadd.f32 %v424, %v425
    %v427 = vrot.slane %v426, 1
    %v428 = vadd.f32 %v426, %v427
    %v429 = vsel %vm386, %v383, 0.0
    %v430 = vrot.slane %v429, 4
    %v431 = vadd.f32 %v429, %v430
    %v432 = vrot.slane %v431, 2
    %v433 = vadd.f32 %v431, %v432
    %v434 = vrot.slane %v433, 1
    %v435 = vadd.f32 %v433, %v434
    %v436 = vsel %vm386, %v385, 0.0
    %v437 = vrot.slane %v436, 4
    %v438 = vadd.f32 %v436, %v437
    %v439 = vrot.slane %v438, 2
    %v440 = vadd.f32 %v438, %v439
    %v441 = vrot.slane %v440, 1
    %v442 = vadd.f32 %v440, %v441
    %v443 = vrcp.pop 5.0
    %v444 = vmul.f32 %v393, %v443
    %v445 = vmul.f32 %v400, %v443
    %v446 = vmul.f32 %v407, %v443
    %v447 = vmul.f32 %v414, %v443
    %v448 = vmul.f32 %v421, %v443
    %v449 = vmul.f32 %v428, %v443
    %v450 = vmul.f32 %v435, %v443
    %v451 = vmul.f32 %v442, %v443
    %452 = vrot.lane.b32.xlu0 %v28, 126
    %v453 = vpop.permute.xlu0 %452
    %s454 = vtos %v453
    %v455 = vstv %s454
    %v457 = vmul.f32 %v26, %v455
    %458 = vrot.lane.b32.xlu0 %v28, 125
    %v459 = vpop.permute.xlu0 %458
    %s460 = vtos %v459
    %v461 = vstv %s460
    %v463 = vadd.f32 %v457, %v461
    %v464 = vlaneseq
    %v465 = vshrl.u32 %v464, 7
    %v466 = vsub.s32 0, %v465
    %v467 = vrot.slane %v463, %v466
    %469 = vbcast.lane.b32.xlu0 %v467, 256
    %v470 = vpop.permute.xlu0 %469
    %v471 = vlaneseq
    %v472 = vshrl.u32 %v471, 7
    %v473 = vsub.s32 1, %v472
    %v474 = vrot.slane %v463, %v473
    %476 = vbcast.lane.b32.xlu0 %v474, 256
    %v477 = vpop.permute.xlu0 %476
    %v478 = vlaneseq
    %v479 = vshrl.u32 %v478, 7
    %v480 = vsub.s32 2, %v479
    %v481 = vrot.slane %v463, %v480
    %483 = vbcast.lane.b32.xlu0 %v481, 256
    %v484 = vpop.permute.xlu0 %483
    %v485 = vlaneseq
    %v486 = vshrl.u32 %v485, 7
    %v487 = vsub.s32 3, %v486
    %v488 = vrot.slane %v463, %v487
    %490 = vbcast.lane.b32.xlu0 %v488, 256
    %v491 = vpop.permute.xlu0 %490
    %v492 = vlaneseq
    %v493 = vshrl.u32 %v492, 7
    %v494 = vsub.s32 4, %v493
    %v495 = vrot.slane %v463, %v494
    %497 = vbcast.lane.b32.xlu0 %v495, 256
    %v498 = vpop.permute.xlu0 %497
    %v499 = vlaneseq
    %v500 = vshrl.u32 %v499, 7
    %v501 = vsub.s32 5, %v500
    %v502 = vrot.slane %v463, %v501
    %504 = vbcast.lane.b32.xlu0 %v502, 256
    %v505 = vpop.permute.xlu0 %504
    %v506 = vlaneseq
    %v507 = vshrl.u32 %v506, 7
    %v508 = vsub.s32 6, %v507
    %v509 = vrot.slane %v463, %v508
    %511 = vbcast.lane.b32.xlu0 %v509, 256
    %v512 = vpop.permute.xlu0 %511
    %v513 = vlaneseq
    %v514 = vshrl.u32 %v513, 7
    %v515 = vsub.s32 7, %v514
    %v516 = vrot.slane %v463, %v515
    %518 = vbcast.lane.b32.xlu0 %v516, 256
    %v519 = vpop.permute.xlu0 %518
    %v520 = vmul.f32 %v470, %v148
    %v521 = vmul.f32 %v477, %v152
    %v522 = vmul.f32 %v484, %v156
    %v523 = vmul.f32 %v491, %v160
    %v524 = vmul.f32 %v498, %v164
    %v525 = vmul.f32 %v505, %v168
    %v526 = vmul.f32 %v512, %v172
    %v527 = vmul.f32 %v519, %v176
    %v528 = vsel %vm193, %v520, -inf
    %529 = vmax.xlane.f32.xlu0 %v528
    %v530 = vpop.xlane.xlu0 %529
    %v531 = vsel %vm193, %v521, -inf
    %532 = vmax.xlane.f32.xlu0 %v531
    %v533 = vpop.xlane.xlu0 %532
    %v534 = vsel %vm193, %v522, -inf
    %535 = vmax.xlane.f32.xlu0 %v534
    %v536 = vpop.xlane.xlu0 %535
    %v537 = vsel %vm193, %v523, -inf
    %538 = vmax.xlane.f32.xlu0 %v537
    %v539 = vpop.xlane.xlu0 %538
    %v540 = vsel %vm193, %v524, -inf
    %541 = vmax.xlane.f32.xlu0 %v540
    %v542 = vpop.xlane.xlu0 %541
    %v543 = vsel %vm193, %v525, -inf
    %544 = vmax.xlane.f32.xlu0 %v543
    %v545 = vpop.xlane.xlu0 %544
    %v546 = vsel %vm193, %v526, -inf
    %547 = vmax.xlane.f32.xlu0 %v546
    %v548 = vpop.xlane.xlu0 %547
    %v549 = vsel %vm193, %v527, -inf
    %550 = vmax.xlane.f32.xlu0 %v549
    %v551 = vpop.xlane.xlu0 %550
    %v552 = vsub.f32 %v520, %v530
    %v553 = vsub.f32 %v521, %v533
    %v554 = vsub.f32 %v522, %v536
    %v555 = vsub.f32 %v523, %v539
    %v556 = vsub.f32 %v524, %v542
    %v557 = vsub.f32 %v525, %v545
    %v558 = vsub.f32 %v526, %v548
    %v559 = vsub.f32 %v527, %v551
    %v560 = vmul.f32 %v552, 1.442695
    %v561 = vpow.pop %v560
    %v562 = vmul.f32 %v553, 1.442695
    %v563 = vpow.pop %v562
    %v564 = vmul.f32 %v554, 1.442695
    %v565 = vpow.pop %v564
    %v566 = vmul.f32 %v555, 1.442695
    %v567 = vpow.pop %v566
    %v568 = vmul.f32 %v556, 1.442695
    %v569 = vpow.pop %v568
    %v570 = vmul.f32 %v557, 1.442695
    %v571 = vpow.pop %v570
    %v572 = vmul.f32 %v558, 1.442695
    %v573 = vpow.pop %v572
    %v574 = vmul.f32 %v559, 1.442695
    %v575 = vpow.pop %v574
    %v576 = vsel %vm193, %v561, 0.0
    %577 = vadd.xlane.f32.xlu0 %v576
    %v578 = vpop.xlane.xlu0 %577
    %v579 = vsel %vm193, %v563, 0.0
    %580 = vadd.xlane.f32.xlu0 %v579
    %v581 = vpop.xlane.xlu0 %580
    %v582 = vsel %vm193, %v565, 0.0
    %583 = vadd.xlane.f32.xlu0 %v582
    %v584 = vpop.xlane.xlu0 %583
    %v585 = vsel %vm193, %v567, 0.0
    %586 = vadd.xlane.f32.xlu0 %v585
    %v587 = vpop.xlane.xlu0 %586
    %v588 = vsel %vm193, %v569, 0.0
    %589 = vadd.xlane.f32.xlu0 %v588
    %v590 = vpop.xlane.xlu0 %589
    %v591 = vsel %vm193, %v571, 0.0
    %592 = vadd.xlane.f32.xlu0 %v591
    %v593 = vpop.xlane.xlu0 %592
    %v594 = vsel %vm193, %v573, 0.0
    %595 = vadd.xlane.f32.xlu0 %v594
    %v596 = vpop.xlane.xlu0 %595
    %v597 = vsel %vm193, %v575, 0.0
    %598 = vadd.xlane.f32.xlu0 %v597
    %v599 = vpop.xlane.xlu0 %598
    %v600 = vrcp.pop %v578
    %v601 = vmul.f32 %v561, %v600
    %v602 = vrcp.pop %v581
    %v603 = vmul.f32 %v563, %v602
    %v604 = vrcp.pop %v584
    %v605 = vmul.f32 %v565, %v604
    %v606 = vrcp.pop %v587
    %v607 = vmul.f32 %v567, %v606
    %v608 = vrcp.pop %v590
    %v609 = vmul.f32 %v569, %v608
    %v610 = vrcp.pop %v593
    %v611 = vmul.f32 %v571, %v610
    %v612 = vrcp.pop %v596
    %v613 = vmul.f32 %v573, %v612
    %v614 = vrcp.pop %v599
    %v615 = vmul.f32 %v575, %v614
    %v616 = vmul.f32 %v601, %v148
    %v617 = vmul.f32 %v603, %v152
    %v618 = vmul.f32 %v605, %v156
    %v619 = vmul.f32 %v607, %v160
    %v620 = vmul.f32 %v609, %v164
    %v621 = vmul.f32 %v611, %v168
    %v622 = vmul.f32 %v613, %v172
    %v623 = vmul.f32 %v615, %v176
    %v624 = vsel %vm193, %v616, 0.0
    %625 = vadd.xlane.f32.xlu0 %v624
    %v626 = vpop.xlane.xlu0 %625
    %v627 = vsel %vm193, %v617, 0.0
    %628 = vadd.xlane.f32.xlu0 %v627
    %v629 = vpop.xlane.xlu0 %628
    %v630 = vsel %vm193, %v618, 0.0
    %631 = vadd.xlane.f32.xlu0 %v630
    %v632 = vpop.xlane.xlu0 %631
    %v633 = vsel %vm193, %v619, 0.0
    %634 = vadd.xlane.f32.xlu0 %v633
    %v635 = vpop.xlane.xlu0 %634
    %v636 = vsel %vm193, %v620, 0.0
    %637 = vadd.xlane.f32.xlu0 %v636
    %v638 = vpop.xlane.xlu0 %637
    %v639 = vsel %vm193, %v621, 0.0
    %640 = vadd.xlane.f32.xlu0 %v639
    %v641 = vpop.xlane.xlu0 %640
    %v642 = vsel %vm193, %v622, 0.0
    %643 = vadd.xlane.f32.xlu0 %v642
    %v644 = vpop.xlane.xlu0 %643
    %v645 = vsel %vm193, %v623, 0.0
    %646 = vadd.xlane.f32.xlu0 %v645
    %v647 = vpop.xlane.xlu0 %646
    %v648 = vlaneseq
    %v649 = vshrl.u32 %v648, 7
    %v650 = vsub.s32 3, %v649
    %v651 = vrot.slane %v25, %v650
    %v652 = vmul.f32 %v626, %v651
    %v653 = vmul.f32 %v629, %v651
    %v654 = vmul.f32 %v632, %v651
    %v655 = vmul.f32 %v635, %v651
    %v656 = vmul.f32 %v638, %v651
    %v657 = vmul.f32 %v641, %v651
    %v658 = vmul.f32 %v644, %v651
    %v659 = vmul.f32 %v647, %v651
    %v660 = vlaneseq
    %v661 = vshrl.u32 %v660, 7
    %v662 = vsub.s32 4, %v661
    %v663 = vrot.slane %v25, %v662
    %v664 = vadd.f32 %v652, %v663
    %v665 = vadd.f32 %v653, %v663
    %v666 = vadd.f32 %v654, %v663
    %v667 = vadd.f32 %v655, %v663
    %v668 = vadd.f32 %v656, %v663
    %v669 = vadd.f32 %v657, %v663
    %v670 = vadd.f32 %v658, %v663
    %v671 = vadd.f32 %v659, %v663
    %v672 = vxor.u32 %v664, 2147483648
    %v673 = vxor.u32 %v665, 2147483648
    %v674 = vxor.u32 %v666, 2147483648
    %v675 = vxor.u32 %v667, 2147483648
    %v676 = vxor.u32 %v668, 2147483648
    %v677 = vxor.u32 %v669, 2147483648
    %v678 = vxor.u32 %v670, 2147483648
    %v679 = vxor.u32 %v671, 2147483648
    %v680 = vmul.f32 %v672, 1.442695
    %v681 = vpow.pop %v680
    %v682 = vmul.f32 %v673, 1.442695
    %v683 = vpow.pop %v682
    %v684 = vmul.f32 %v674, 1.442695
    %v685 = vpow.pop %v684
    %v686 = vmul.f32 %v675, 1.442695
    %v687 = vpow.pop %v686
    %v688 = vmul.f32 %v676, 1.442695
    %v689 = vpow.pop %v688
    %v690 = vmul.f32 %v677, 1.442695
    %v691 = vpow.pop %v690
    %v692 = vmul.f32 %v678, 1.442695
    %v693 = vpow.pop %v692
    %v694 = vmul.f32 %v679, 1.442695
    %v695 = vpow.pop %v694
    %v696 = vadd.f32 %v681, 1.0
    %v697 = vadd.f32 %v683, 1.0
    %v698 = vadd.f32 %v685, 1.0
    %v699 = vadd.f32 %v687, 1.0
    %v700 = vadd.f32 %v689, 1.0
    %v701 = vadd.f32 %v691, 1.0
    %v702 = vadd.f32 %v693, 1.0
    %v703 = vadd.f32 %v695, 1.0
    %v704 = vrcp.pop %v696
    %v705 = vmul.f32 1.0, %v704
    %v706 = vrcp.pop %v697
    %v707 = vmul.f32 1.0, %v706
    %v708 = vrcp.pop %v698
    %v709 = vmul.f32 1.0, %v708
    %v710 = vrcp.pop %v699
    %v711 = vmul.f32 1.0, %v710
    %v712 = vrcp.pop %v700
    %v713 = vmul.f32 1.0, %v712
    %v714 = vrcp.pop %v701
    %v715 = vmul.f32 1.0, %v714
    %v716 = vrcp.pop %v702
    %v717 = vmul.f32 1.0, %v716
    %v718 = vrcp.pop %v703
    %v719 = vmul.f32 1.0, %v718
    %v720 = vsel %vm386, %v705, 0.0
    %v721 = vrot.slane %v720, 4
    %v722 = vadd.f32 %v720, %v721
    %v723 = vrot.slane %v722, 2
    %v724 = vadd.f32 %v722, %v723
    %v725 = vrot.slane %v724, 1
    %v726 = vadd.f32 %v724, %v725
    %v727 = vsel %vm386, %v707, 0.0
    %v728 = vrot.slane %v727, 4
    %v729 = vadd.f32 %v727, %v728
    %v730 = vrot.slane %v729, 2
    %v731 = vadd.f32 %v729, %v730
    %v732 = vrot.slane %v731, 1
    %v733 = vadd.f32 %v731, %v732
    %v734 = vsel %vm386, %v709, 0.0
    %v735 = vrot.slane %v734, 4
    %v736 = vadd.f32 %v734, %v735
    %v737 = vrot.slane %v736, 2
    %v738 = vadd.f32 %v736, %v737
    %v739 = vrot.slane %v738, 1
    %v740 = vadd.f32 %v738, %v739
    %v741 = vsel %vm386, %v711, 0.0
    %v742 = vrot.slane %v741, 4
    %v743 = vadd.f32 %v741, %v742
    %v744 = vrot.slane %v743, 2
    %v745 = vadd.f32 %v743, %v744
    %v746 = vrot.slane %v745, 1
    %v747 = vadd.f32 %v745, %v746
    %v748 = vsel %vm386, %v713, 0.0
    %v749 = vrot.slane %v748, 4
    %v750 = vadd.f32 %v748, %v749
    %v751 = vrot.slane %v750, 2
    %v752 = vadd.f32 %v750, %v751
    %v753 = vrot.slane %v752, 1
    %v754 = vadd.f32 %v752, %v753
    %v755 = vsel %vm386, %v715, 0.0
    %v756 = vrot.slane %v755, 4
    %v757 = vadd.f32 %v755, %v756
    %v758 = vrot.slane %v757, 2
    %v759 = vadd.f32 %v757, %v758
    %v760 = vrot.slane %v759, 1
    %v761 = vadd.f32 %v759, %v760
    %v762 = vsel %vm386, %v717, 0.0
    %v763 = vrot.slane %v762, 4
    %v764 = vadd.f32 %v762, %v763
    %v765 = vrot.slane %v764, 2
    %v766 = vadd.f32 %v764, %v765
    %v767 = vrot.slane %v766, 1
    %v768 = vadd.f32 %v766, %v767
    %v769 = vsel %vm386, %v719, 0.0
    %v770 = vrot.slane %v769, 4
    %v771 = vadd.f32 %v769, %v770
    %v772 = vrot.slane %v771, 2
    %v773 = vadd.f32 %v771, %v772
    %v774 = vrot.slane %v773, 1
    %v775 = vadd.f32 %v773, %v774
    %v776 = vmul.f32 %v726, %v443
    %v777 = vmul.f32 %v733, %v443
    %v778 = vmul.f32 %v740, %v443
    %v779 = vmul.f32 %v747, %v443
    %v780 = vmul.f32 %v754, %v443
    %v781 = vmul.f32 %v761, %v443
    %v782 = vmul.f32 %v768, %v443
    %v783 = vmul.f32 %v775, %v443
    %vm792 = vcmask 1041409
    %v793 = vsel %vm792, %v445, %v444
    %vm794 = vcmask 1042434
    %v795 = vsel %vm794, %v446, %v793
    %vm796 = vcmask 1043459
    %v797 = vsel %vm796, %v447, %v795
    %vm798 = vcmask 1044484
    %v799 = vsel %vm798, %v448, %v797
    %vm800 = vcmask 1045509
    %v801 = vsel %vm800, %v449, %v799
    %vm802 = vcmask 1046534
    %v803 = vsel %vm802, %v450, %v801
    %vm804 = vcmask 1047559
    %v805 = vsel %vm804, %v451, %v803
    %v815 = vsel %vm792, %v777, %v776
    %v816 = vsel %vm794, %v778, %v815
    %v817 = vsel %vm796, %v779, %v816
    %v818 = vsel %vm798, %v780, %v817
    %v819 = vsel %vm800, %v781, %v818
    %v820 = vsel %vm802, %v782, %v819
    %v821 = vsel %vm804, %v783, %v820
    %822 = vrot.lane.b32.xlu0 %v821, 32
    %v823 = vpop.permute.xlu0 %822
    %vm825 = vcmask 261120
    %v826 = vsel %vm825, %v805, %v823
    %v827 = vlaneseq
    %v828 = vshrl.u32 %v827, 7
    %v829 = vsub.s32 0, %v828
    %v830 = vrot.slane %v25, %v829
    %vm831 = vcmask 523264
    %v833 = vsel %vm831, %v826, 0
    %835 = vmatprep.subr.mxu0 0.0
    %836 = vmatpush1.msra.mxu0 0.0
    %837 = vmatprep.subr.mxu0 0.0
    %838 = vmatpush1.msra.mxu0 0.0
    %839 = vmatprep.subr.mxu0 0.0
    %840 = vmatpush1.msra.mxu0 0.0
    %841 = vmatprep.subr.mxu0 0.0
    %842 = vmatpush1.msra.mxu0 0.0
    %843 = vmatprep.subr.mxu0 0.0
    %844 = vmatpush1.msra.mxu0 0.0
    %845 = vmatprep.subr.mxu0 0.0
    %846 = vmatpush1.msra.mxu0 0.0
    %847 = vmatprep.subr.mxu0 0.0
    %848 = vmatpush1.msra.mxu0 0.0
    %849 = vmatprep.subr.mxu0 0.0
    %850 = vmatpush1.msra.mxu0 0.0
    %851 = vmatprep.subr.mxu0 0.0
    %852 = vmatpush1.msra.mxu0 %v24
    %853 = vmatprep.subr.mxu0 0.0
    %854 = vmatpush1.msra.mxu0 %v23
    %855 = vmatprep.subr.mxu0 0.0
    %856 = vmatpush1.msra.mxu0 %v22
    %857 = vmatprep.subr.mxu0 0.0
    %858 = vmatpush1.msra.mxu0 %v21
    %859 = vmatprep.subr.mxu0 0.0
    %860 = vmatpush1.msra.mxu0 %v20
    %861 = vmatprep.subr.mxu0 0.0
    %862 = vmatpush1.msra.mxu0 %v19
    %863 = vmatprep.subr.mxu0 0.0
    %864 = vmatpush1.msra.mxu0 %v18
    %865 = vmatprep.subr.mxu0 0.0
    %866 = vmatpush1.msra.mxu0 %v17
    %867 = vmatprep.subr.mxu0 0.0
    %868 = vmatpush2.msra.mxu0 0.0
    %869 = vmatprep.subr.mxu0 0.0
    %870 = vmatpush2.msra.mxu0 0.0
    %871 = vmatprep.subr.mxu0 0.0
    %872 = vmatpush2.msra.mxu0 0.0
    %873 = vmatprep.subr.mxu0 0.0
    %874 = vmatpush2.msra.mxu0 0.0
    %875 = vmatprep.subr.mxu0 0.0
    %876 = vmatpush2.msra.mxu0 0.0
    %877 = vmatprep.subr.mxu0 0.0
    %878 = vmatpush2.msra.mxu0 0.0
    %879 = vmatprep.subr.mxu0 0.0
    %880 = vmatpush2.msra.mxu0 0.0
    %881 = vmatprep.subr.mxu0 0.0
    %882 = vmatpush2.msra.mxu0 0.0
    %883 = vmatprep.subr.mxu0 0.0
    %884 = vmatpush2.msra.mxu0 0.0
    %885 = vmatprep.subr.mxu0 0.0
    %886 = vmatpush2.msra.mxu0 0.0
    %887 = vmatprep.subr.mxu0 0.0
    %888 = vmatpush2.msra.mxu0 0.0
    %889 = vmatprep.subr.mxu0 0.0
    %890 = vmatpush2.msra.mxu0 0.0
    %891 = vmatprep.subr.mxu0 0.0
    %892 = vmatpush2.msra.mxu0 0.0
    %893 = vmatprep.subr.mxu0 0.0
    %894 = vmatpush2.msra.mxu0 0.0
    %895 = vmatprep.subr.mxu0 0.0
    %896 = vmatpush2.msra.mxu0 0.0
    %897 = vmatprep.subr.mxu0 0.0
    %898 = vmatpush2.msra.mxu0 0.0
    %899 = vmatprep.mubr.f32.mxu0 0.0
    %900 = vmatmul.mubr.f32.gmra.mxu0 %v833
    %v901 = vpop.f32.mrf.mxu0
    %v902 = vadd.f32 %v830, %v901
    %v903 = vpop.f32.mrf.mxu0
    %904 = vdwg.mxu0
    %v905 = vmul.f32 %v902, 1.442695
    %v906 = vpow.pop %v905
    %908 = vrot.lane.b32.xlu0 %v906, 5
    %v909 = vpop.permute.xlu0 %908
    %v911 = vmul.f32 %v26, %v909
    %v912 = vadd.f32 %v911, %v902
    %vm913 = vcmask 23552
    %v914 = vsel %vm913, %v902, 0.0
    %915 = vadd.xlane.f32.xlu0 %v914
    %v916 = vpop.xlane.xlu0 %915
    %v917 = vadd.f32 %v916, 0.0
    %vm918 = vcmask 64552
    %919 = vst.msk [vmem:[#allocation2] sm:$0xff] %vm918, %v912
    %s920 = scalar_lea.vmem %s1, 72
    %v921 = vld [vmem:[%s920] sm:$0xff]
    %v922 = vld [vmem:[%s920 + $0x8] sm:$0xff]
    %v923 = vld [vmem:[%s920 + $0x10] sm:$0xff]
    %v924 = vld [vmem:[%s920 + $0x18] sm:$0xff]
    %v925 = vld [vmem:[%s920 + $0x20] sm:$0xff]
    %v926 = vld [vmem:[%s920 + $0x28] sm:$0xff]
    %v927 = vld [vmem:[%s920 + $0x30] sm:$0xff]
    %v928 = vld [vmem:[%s920 + $0x38] sm:$0xff]
    %v929 = vld [vmem:[%s920 + $0x40] sm:$0x3f]
    %v930 = vld [vmem:[#allocation2] sm:$0xff]
    %v932 = vrot.slane %v929, 5
    %s933 = vtos %v932
    %v934 = vstv %s933
    %v936 = vmul.f32 %v930, %v934
    %937 = vrot.lane.b32.xlu0 %v932, 127
    %v938 = vpop.permute.xlu0 %937
    %s939 = vtos %v938
    %v940 = vstv %s939
    %v942 = vadd.f32 %v936, %v940
    %v943 = vlaneseq
    %v944 = vshrl.u32 %v943, 7
    %v945 = vsub.s32 0, %v944
    %v946 = vrot.slane %v942, %v945
    %s948 = sor.u32 256, 5
    %949 = vbcast.lane.b32.xlu0 %v946, %s948
    %v950 = vpop.permute.xlu0 %949
    %v951 = vlaneseq
    %v952 = vshrl.u32 %v951, 7
    %v953 = vsub.s32 1, %v952
    %v954 = vrot.slane %v942, %v953
    %s956 = sor.u32 256, 5
    %957 = vbcast.lane.b32.xlu0 %v954, %s956
    %v958 = vpop.permute.xlu0 %957
    %v959 = vlaneseq
    %v960 = vshrl.u32 %v959, 7
    %v961 = vsub.s32 2, %v960
    %v962 = vrot.slane %v942, %v961
    %s964 = sor.u32 256, 5
    %965 = vbcast.lane.b32.xlu0 %v962, %s964
    %v966 = vpop.permute.xlu0 %965
    %v967 = vlaneseq
    %v968 = vshrl.u32 %v967, 7
    %v969 = vsub.s32 3, %v968
    %v970 = vrot.slane %v942, %v969
    %s972 = sor.u32 256, 5
    %973 = vbcast.lane.b32.xlu0 %v970, %s972
    %v974 = vpop.permute.xlu0 %973
    %v975 = vlaneseq
    %v976 = vshrl.u32 %v975, 7
    %v977 = vsub.s32 4, %v976
    %v978 = vrot.slane %v942, %v977
    %s980 = sor.u32 256, 5
    %981 = vbcast.lane.b32.xlu0 %v978, %s980
    %v982 = vpop.permute.xlu0 %981
    %v983 = vlaneseq
    %v984 = vshrl.u32 %v983, 7
    %v985 = vsub.s32 5, %v984
    %v986 = vrot.slane %v942, %v985
    %s988 = sor.u32 256, 5
    %989 = vbcast.lane.b32.xlu0 %v986, %s988
    %v990 = vpop.permute.xlu0 %989
    %v991 = vlaneseq
    %v992 = vshrl.u32 %v991, 7
    %v993 = vsub.s32 6, %v992
    %v994 = vrot.slane %v942, %v993
    %s996 = sor.u32 256, 5
    %997 = vbcast.lane.b32.xlu0 %v994, %s996
    %v998 = vpop.permute.xlu0 %997
    %v999 = vlaneseq
    %v1000 = vshrl.u32 %v999, 7
    %v1001 = vsub.s32 7, %v1000
    %v1002 = vrot.slane %v942, %v1001
    %s1004 = sor.u32 256, 5
    %1005 = vbcast.lane.b32.xlu0 %v1002, %s1004
    %v1006 = vpop.permute.xlu0 %1005
    %v1008 = vcombine.high %v930, %v930
    %v1010 = vunpack.c.l.s4 1966171168
    %v1011 = vunpack.c.0.s8 %v1010
    %v1012 = vlaneseq
    %v1013 = vshrl.u32 %v1012, 7
    %v1014 = vsub.s32 %v1011, %v1013
    %v1015 = vrot.slane %v930, %v1014
    %v1017 = vunpack.c.l.s4 1966171168
    %v1018 = vunpack.c.0.s8 %v1017
    %v1019 = vlaneseq
    %v1020 = vshrl.u32 %v1019, 7
    %v1021 = vsub.s32 %v1018, %v1020
    %v1022 = vrot.slane %v1008, %v1021
    %v1023 = vcombine.high %v1015, %v1015
    %v1024 = vcombine.high %v1022, %v1022
    %v1026 = vunpack.c.l.s4 1966171168
    %v1027 = vunpack.c.0.s8 %v1026
    %v1028 = vlaneseq
    %v1029 = vshrl.u32 %v1028, 7
    %v1030 = vsub.s32 %v1027, %v1029
    %v1031 = vrot.slane %v1015, %v1030
    %v1033 = vunpack.c.l.s4 1966171168
    %v1034 = vunpack.c.0.s8 %v1033
    %v1035 = vlaneseq
    %v1036 = vshrl.u32 %v1035, 7
    %v1037 = vsub.s32 %v1034, %v1036
    %v1038 = vrot.slane %v1022, %v1037
    %v1040 = vunpack.c.l.s4 1966171168
    %v1041 = vunpack.c.0.s8 %v1040
    %v1042 = vlaneseq
    %v1043 = vshrl.u32 %v1042, 7
    %v1044 = vsub.s32 %v1041, %v1043
    %v1045 = vrot.slane %v1023, %v1044
    %v1047 = vunpack.c.l.s4 1966171168
    %v1048 = vunpack.c.0.s8 %v1047
    %v1049 = vlaneseq
    %v1050 = vshrl.u32 %v1049, 7
    %v1051 = vsub.s32 %v1048, %v1050
    %v1052 = vrot.slane %v1024, %v1051
    %v1053 = vcombine.high %v1031, %v1031
    %v1054 = vcombine.high %v1038, %v1038
    %v1055 = vcombine.high %v1045, %v1045
    %v1056 = vcombine.high %v1052, %v1052
    %v1057 = vlaneseq
    %v1058 = vshrl.u32 %v1057, 7
    %v1059 = vsub.s32 0, %v1058
    %v1060 = vrot.slane %v1031, %v1059
    %v1061 = vlaneseq
    %v1062 = vshrl.u32 %v1061, 7
    %v1063 = vsub.s32 0, %v1062
    %v1064 = vrot.slane %v1045, %v1063
    %v1065 = vlaneseq
    %v1066 = vshrl.u32 %v1065, 7
    %v1067 = vsub.s32 0, %v1066
    %v1068 = vrot.slane %v1053, %v1067
    %v1069 = vlaneseq
    %v1070 = vshrl.u32 %v1069, 7
    %v1071 = vsub.s32 0, %v1070
    %v1072 = vrot.slane %v1055, %v1071
    %v1073 = vlaneseq
    %v1074 = vshrl.u32 %v1073, 7
    %v1075 = vsub.s32 0, %v1074
    %v1076 = vrot.slane %v1038, %v1075
    %v1077 = vlaneseq
    %v1078 = vshrl.u32 %v1077, 7
    %v1079 = vsub.s32 0, %v1078
    %v1080 = vrot.slane %v1052, %v1079
    %v1081 = vlaneseq
    %v1082 = vshrl.u32 %v1081, 7
    %v1083 = vsub.s32 0, %v1082
    %v1084 = vrot.slane %v1054, %v1083
    %v1085 = vlaneseq
    %v1086 = vshrl.u32 %v1085, 7
    %v1087 = vsub.s32 0, %v1086
    %v1088 = vrot.slane %v1056, %v1087
    %v1097 = vmul.f32 %v950, %v1060
    %v1098 = vmul.f32 %v958, %v1064
    %v1099 = vmul.f32 %v966, %v1068
    %v1100 = vmul.f32 %v974, %v1072
    %v1101 = vmul.f32 %v982, %v1076
    %v1102 = vmul.f32 %v990, %v1080
    %v1103 = vmul.f32 %v998, %v1084
    %v1104 = vmul.f32 %v1006, %v1088
    %vm1105 = vcmask 59432
    %v1106 = vsel %vm1105, %v1097, -inf
    %1107 = vmax.xlane.f32.xlu0 %v1106
    %v1108 = vpop.xlane.xlu0 %1107
    %v1109 = vsel %vm1105, %v1098, -inf
    %1110 = vmax.xlane.f32.xlu0 %v1109
    %v1111 = vpop.xlane.xlu0 %1110
    %v1112 = vsel %vm1105, %v1099, -inf
    %1113 = vmax.xlane.f32.xlu0 %v1112
    %v1114 = vpop.xlane.xlu0 %1113
    %v1115 = vsel %vm1105, %v1100, -inf
    %1116 = vmax.xlane.f32.xlu0 %v1115
    %v1117 = vpop.xlane.xlu0 %1116
    %v1118 = vsel %vm1105, %v1101, -inf
    %1119 = vmax.xlane.f32.xlu0 %v1118
    %v1120 = vpop.xlane.xlu0 %1119
    %v1121 = vsel %vm1105, %v1102, -inf
    %1122 = vmax.xlane.f32.xlu0 %v1121
    %v1123 = vpop.xlane.xlu0 %1122
    %v1124 = vsel %vm1105, %v1103, -inf
    %1125 = vmax.xlane.f32.xlu0 %v1124
    %v1126 = vpop.xlane.xlu0 %1125
    %v1127 = vsel %vm1105, %v1104, -inf
    %1128 = vmax.xlane.f32.xlu0 %v1127
    %v1129 = vpop.xlane.xlu0 %1128
    %v1130 = vsub.f32 %v1097, %v1108
    %v1131 = vsub.f32 %v1098, %v1111
    %v1132 = vsub.f32 %v1099, %v1114
    %v1133 = vsub.f32 %v1100, %v1117
    %v1134 = vsub.f32 %v1101, %v1120
    %v1135 = vsub.f32 %v1102, %v1123
    %v1136 = vsub.f32 %v1103, %v1126
    %v1137 = vsub.f32 %v1104, %v1129
    %v1138 = vmul.f32 %v1130, 1.442695
    %v1139 = vpow.pop %v1138
    %v1140 = vmul.f32 %v1131, 1.442695
    %v1141 = vpow.pop %v1140
    %v1142 = vmul.f32 %v1132, 1.442695
    %v1143 = vpow.pop %v1142
    %v1144 = vmul.f32 %v1133, 1.442695
    %v1145 = vpow.pop %v1144
    %v1146 = vmul.f32 %v1134, 1.442695
    %v1147 = vpow.pop %v1146
    %v1148 = vmul.f32 %v1135, 1.442695
    %v1149 = vpow.pop %v1148
    %v1150 = vmul.f32 %v1136, 1.442695
    %v1151 = vpow.pop %v1150
    %v1152 = vmul.f32 %v1137, 1.442695
    %v1153 = vpow.pop %v1152
    %1162 = vrot.lane.b32.xlu0 %v1139, 123
    %v1163 = vpop.permute.xlu0 %1162
    %1164 = vrot.lane.b32.xlu0 %v1141, 123
    %v1165 = vpop.permute.xlu0 %1164
    %1166 = vrot.lane.b32.xlu0 %v1143, 123
    %v1167 = vpop.permute.xlu0 %1166
    %1168 = vrot.lane.b32.xlu0 %v1145, 123
    %v1169 = vpop.permute.xlu0 %1168
    %1170 = vrot.lane.b32.xlu0 %v1147, 123
    %v1171 = vpop.permute.xlu0 %1170
    %1172 = vrot.lane.b32.xlu0 %v1149, 123
    %v1173 = vpop.permute.xlu0 %1172
    %1174 = vrot.lane.b32.xlu0 %v1151, 123
    %v1175 = vpop.permute.xlu0 %1174
    %1176 = vrot.lane.b32.xlu0 %v1153, 123
    %v1177 = vpop.permute.xlu0 %1176
    %vm1186 = vcmask 18432
    %v1187 = vsel %vm1186, %v1163, 0.0
    %1188 = vadd.xlane.f32.xlu0 %v1187
    %v1189 = vpop.xlane.xlu0 %1188
    %v1190 = vsel %vm1186, %v1165, 0.0
    %1191 = vadd.xlane.f32.xlu0 %v1190
    %v1192 = vpop.xlane.xlu0 %1191
    %v1193 = vsel %vm1186, %v1167, 0.0
    %1194 = vadd.xlane.f32.xlu0 %v1193
    %v1195 = vpop.xlane.xlu0 %1194
    %v1196 = vsel %vm1186, %v1169, 0.0
    %1197 = vadd.xlane.f32.xlu0 %v1196
    %v1198 = vpop.xlane.xlu0 %1197
    %v1199 = vsel %vm1186, %v1171, 0.0
    %1200 = vadd.xlane.f32.xlu0 %v1199
    %v1201 = vpop.xlane.xlu0 %1200
    %v1202 = vsel %vm1186, %v1173, 0.0
    %1203 = vadd.xlane.f32.xlu0 %v1202
    %v1204 = vpop.xlane.xlu0 %1203
    %v1205 = vsel %vm1186, %v1175, 0.0
    %1206 = vadd.xlane.f32.xlu0 %v1205
    %v1207 = vpop.xlane.xlu0 %1206
    %v1208 = vsel %vm1186, %v1177, 0.0
    %1209 = vadd.xlane.f32.xlu0 %v1208
    %v1210 = vpop.xlane.xlu0 %1209
    %v1211 = vrcp.pop %v1189
    %v1212 = vmul.f32 %v1139, %v1211
    %v1213 = vrcp.pop %v1192
    %v1214 = vmul.f32 %v1141, %v1213
    %v1215 = vrcp.pop %v1195
    %v1216 = vmul.f32 %v1143, %v1215
    %v1217 = vrcp.pop %v1198
    %v1218 = vmul.f32 %v1145, %v1217
    %v1219 = vrcp.pop %v1201
    %v1220 = vmul.f32 %v1147, %v1219
    %v1221 = vrcp.pop %v1204
    %v1222 = vmul.f32 %v1149, %v1221
    %v1223 = vrcp.pop %v1207
    %v1224 = vmul.f32 %v1151, %v1223
    %v1225 = vrcp.pop %v1210
    %v1226 = vmul.f32 %v1153, %v1225
    %v1227 = vmul.f32 %v1212, %v1060
    %v1228 = vmul.f32 %v1214, %v1064
    %v1229 = vmul.f32 %v1216, %v1068
    %v1230 = vmul.f32 %v1218, %v1072
    %v1231 = vmul.f32 %v1220, %v1076
    %v1232 = vmul.f32 %v1222, %v1080
    %v1233 = vmul.f32 %v1224, %v1084
    %v1234 = vmul.f32 %v1226, %v1088
    %1243 = vrot.lane.b32.xlu0 %v1227, 123
    %v1244 = vpop.permute.xlu0 %1243
    %1245 = vrot.lane.b32.xlu0 %v1228, 123
    %v1246 = vpop.permute.xlu0 %1245
    %1247 = vrot.lane.b32.xlu0 %v1229, 123
    %v1248 = vpop.permute.xlu0 %1247
    %1249 = vrot.lane.b32.xlu0 %v1230, 123
    %v1250 = vpop.permute.xlu0 %1249
    %1251 = vrot.lane.b32.xlu0 %v1231, 123
    %v1252 = vpop.permute.xlu0 %1251
    %1253 = vrot.lane.b32.xlu0 %v1232, 123
    %v1254 = vpop.permute.xlu0 %1253
    %1255 = vrot.lane.b32.xlu0 %v1233, 123
    %v1256 = vpop.permute.xlu0 %1255
    %1257 = vrot.lane.b32.xlu0 %v1234, 123
    %v1258 = vpop.permute.xlu0 %1257
    %v1267 = vsel %vm1186, %v1244, 0.0
    %1268 = vadd.xlane.f32.xlu0 %v1267
    %v1269 = vpop.xlane.xlu0 %1268
    %v1270 = vsel %vm1186, %v1246, 0.0
    %1271 = vadd.xlane.f32.xlu0 %v1270
    %v1272 = vpop.xlane.xlu0 %1271
    %v1273 = vsel %vm1186, %v1248, 0.0
    %1274 = vadd.xlane.f32.xlu0 %v1273
    %v1275 = vpop.xlane.xlu0 %1274
    %v1276 = vsel %vm1186, %v1250, 0.0
    %1277 = vadd.xlane.f32.xlu0 %v1276
    %v1278 = vpop.xlane.xlu0 %1277
    %v1279 = vsel %vm1186, %v1252, 0.0
    %1280 = vadd.xlane.f32.xlu0 %v1279
    %v1281 = vpop.xlane.xlu0 %1280
    %v1282 = vsel %vm1186, %v1254, 0.0
    %1283 = vadd.xlane.f32.xlu0 %v1282
    %v1284 = vpop.xlane.xlu0 %1283
    %v1285 = vsel %vm1186, %v1256, 0.0
    %1286 = vadd.xlane.f32.xlu0 %v1285
    %v1287 = vpop.xlane.xlu0 %1286
    %v1288 = vsel %vm1186, %v1258, 0.0
    %1289 = vadd.xlane.f32.xlu0 %v1288
    %v1290 = vpop.xlane.xlu0 %1289
    %v1291 = vlaneseq
    %v1292 = vshrl.u32 %v1291, 7
    %v1293 = vsub.s32 1, %v1292
    %v1294 = vrot.slane %v929, %v1293
    %v1295 = vmul.f32 %v1269, %v1294
    %v1296 = vmul.f32 %v1272, %v1294
    %v1297 = vmul.f32 %v1275, %v1294
    %v1298 = vmul.f32 %v1278, %v1294
    %v1299 = vmul.f32 %v1281, %v1294
    %v1300 = vmul.f32 %v1284, %v1294
    %v1301 = vmul.f32 %v1287, %v1294
    %v1302 = vmul.f32 %v1290, %v1294
    %v1303 = vlaneseq
    %v1304 = vshrl.u32 %v1303, 7
    %v1305 = vsub.s32 2, %v1304
    %v1306 = vrot.slane %v929, %v1305
    %v1307 = vadd.f32 %v1295, %v1306
    %v1308 = vadd.f32 %v1296, %v1306
    %v1309 = vadd.f32 %v1297, %v1306
    %v1310 = vadd.f32 %v1298, %v1306
    %v1311 = vadd.f32 %v1299, %v1306
    %v1312 = vadd.f32 %v1300, %v1306
    %v1313 = vadd.f32 %v1301, %v1306
    %v1314 = vadd.f32 %v1302, %v1306
    %v1315 = vxor.u32 %v1307, 2147483648
    %v1316 = vxor.u32 %v1308, 2147483648
    %v1317 = vxor.u32 %v1309, 2147483648
    %v1318 = vxor.u32 %v1310, 2147483648
    %v1319 = vxor.u32 %v1311, 2147483648
    %v1320 = vxor.u32 %v1312, 2147483648
    %v1321 = vxor.u32 %v1313, 2147483648
    %v1322 = vxor.u32 %v1314, 2147483648
    %v1323 = vmul.f32 %v1315, 1.442695
    %v1324 = vpow.pop %v1323
    %v1325 = vmul.f32 %v1316, 1.442695
    %v1326 = vpow.pop %v1325
    %v1327 = vmul.f32 %v1317, 1.442695
    %v1328 = vpow.pop %v1327
    %v1329 = vmul.f32 %v1318, 1.442695
    %v1330 = vpow.pop %v1329
    %v1331 = vmul.f32 %v1319, 1.442695
    %v1332 = vpow.pop %v1331
    %v1333 = vmul.f32 %v1320, 1.442695
    %v1334 = vpow.pop %v1333
    %v1335 = vmul.f32 %v1321, 1.442695
    %v1336 = vpow.pop %v1335
    %v1337 = vmul.f32 %v1322, 1.442695
    %v1338 = vpow.pop %v1337
    %v1339 = vadd.f32 %v1324, 1.0
    %v1340 = vadd.f32 %v1326, 1.0
    %v1341 = vadd.f32 %v1328, 1.0
    %v1342 = vadd.f32 %v1330, 1.0
    %v1343 = vadd.f32 %v1332, 1.0
    %v1344 = vadd.f32 %v1334, 1.0
    %v1345 = vadd.f32 %v1336, 1.0
    %v1346 = vadd.f32 %v1338, 1.0
    %v1347 = vrcp.pop %v1339
    %v1348 = vmul.f32 1.0, %v1347
    %v1349 = vrcp.pop %v1340
    %v1350 = vmul.f32 1.0, %v1349
    %v1351 = vrcp.pop %v1341
    %v1352 = vmul.f32 1.0, %v1351
    %v1353 = vrcp.pop %v1342
    %v1354 = vmul.f32 1.0, %v1353
    %v1355 = vrcp.pop %v1343
    %v1356 = vmul.f32 1.0, %v1355
    %v1357 = vrcp.pop %v1344
    %v1358 = vmul.f32 1.0, %v1357
    %v1359 = vrcp.pop %v1345
    %v1360 = vmul.f32 1.0, %v1359
    %v1361 = vrcp.pop %v1346
    %v1362 = vmul.f32 1.0, %v1361
    %vm1363 = vcmask 256000
    %v1364 = vsel %vm1363, %v1348, 0.0
    %v1365 = vrot.slane %v1364, 4
    %v1366 = vadd.f32 %v1364, %v1365
    %v1367 = vrot.slane %v1366, 2
    %v1368 = vadd.f32 %v1366, %v1367
    %v1369 = vrot.slane %v1368, 1
    %v1370 = vadd.f32 %v1368, %v1369
    %v1371 = vsel %vm1363, %v1350, 0.0
    %v1372 = vrot.slane %v1371, 4
    %v1373 = vadd.f32 %v1371, %v1372
    %v1374 = vrot.slane %v1373, 2
    %v1375 = vadd.f32 %v1373, %v1374
    %v1376 = vrot.slane %v1375, 1
    %v1377 = vadd.f32 %v1375, %v1376
    %v1378 = vsel %vm1363, %v1352, 0.0
    %v1379 = vrot.slane %v1378, 4
    %v1380 = vadd.f32 %v1378, %v1379
    %v1381 = vrot.slane %v1380, 2
    %v1382 = vadd.f32 %v1380, %v1381
    %v1383 = vrot.slane %v1382, 1
    %v1384 = vadd.f32 %v1382, %v1383
    %v1385 = vsel %vm1363, %v1354, 0.0
    %v1386 = vrot.slane %v1385, 4
    %v1387 = vadd.f32 %v1385, %v1386
    %v1388 = vrot.slane %v1387, 2
    %v1389 = vadd.f32 %v1387, %v1388
    %v1390 = vrot.slane %v1389, 1
    %v1391 = vadd.f32 %v1389, %v1390
    %v1392 = vsel %vm1363, %v1356, 0.0
    %v1393 = vrot.slane %v1392, 4
    %v1394 = vadd.f32 %v1392, %v1393
    %v1395 = vrot.slane %v1394, 2
    %v1396 = vadd.f32 %v1394, %v1395
    %v1397 = vrot.slane %v1396, 1
    %v1398 = vadd.f32 %v1396, %v1397
    %v1399 = vsel %vm1363, %v1358, 0.0
    %v1400 = vrot.slane %v1399, 4
    %v1401 = vadd.f32 %v1399, %v1400
    %v1402 = vrot.slane %v1401, 2
    %v1403 = vadd.f32 %v1401, %v1402
    %v1404 = vrot.slane %v1403, 1
    %v1405 = vadd.f32 %v1403, %v1404
    %v1406 = vsel %vm1363, %v1360, 0.0
    %v1407 = vrot.slane %v1406, 4
    %v1408 = vadd.f32 %v1406, %v1407
    %v1409 = vrot.slane %v1408, 2
    %v1410 = vadd.f32 %v1408, %v1409
    %v1411 = vrot.slane %v1410, 1
    %v1412 = vadd.f32 %v1410, %v1411
    %v1413 = vsel %vm1363, %v1362, 0.0
    %v1414 = vrot.slane %v1413, 4
    %v1415 = vadd.f32 %v1413, %v1414
    %v1416 = vrot.slane %v1415, 2
    %v1417 = vadd.f32 %v1415, %v1416
    %v1418 = vrot.slane %v1417, 1
    %v1419 = vadd.f32 %v1417, %v1418
    %v1420 = vrcp.pop 3.0
    %v1421 = vmul.f32 %v1370, %v1420
    %v1422 = vmul.f32 %v1377, %v1420
    %v1423 = vmul.f32 %v1384, %v1420
    %v1424 = vmul.f32 %v1391, %v1420
    %v1425 = vmul.f32 %v1398, %v1420
    %v1426 = vmul.f32 %v1405, %v1420
    %v1427 = vmul.f32 %v1412, %v1420
    %v1428 = vmul.f32 %v1419, %v1420
    %1429 = vrot.lane.b32.xlu0 %v932, 126
    %v1430 = vpop.permute.xlu0 %1429
    %s1431 = vtos %v1430
    %v1432 = vstv %s1431
    %v1434 = vmul.f32 %v930, %v1432
    %1435 = vrot.lane.b32.xlu0 %v932, 125
    %v1436 = vpop.permute.xlu0 %1435
    %s1437 = vtos %v1436
    %v1438 = vstv %s1437
    %v1440 = vadd.f32 %v1434, %v1438
    %v1441 = vlaneseq
    %v1442 = vshrl.u32 %v1441, 7
    %v1443 = vsub.s32 0, %v1442
    %v1444 = vrot.slane %v1440, %v1443
    %s1446 = sor.u32 256, 5
    %1447 = vbcast.lane.b32.xlu0 %v1444, %s1446
    %v1448 = vpop.permute.xlu0 %1447
    %v1449 = vlaneseq
    %v1450 = vshrl.u32 %v1449, 7
    %v1451 = vsub.s32 1, %v1450
    %v1452 = vrot.slane %v1440, %v1451
    %s1454 = sor.u32 256, 5
    %1455 = vbcast.lane.b32.xlu0 %v1452, %s1454
    %v1456 = vpop.permute.xlu0 %1455
    %v1457 = vlaneseq
    %v1458 = vshrl.u32 %v1457, 7
    %v1459 = vsub.s32 2, %v1458
    %v1460 = vrot.slane %v1440, %v1459
    %s1462 = sor.u32 256, 5
    %1463 = vbcast.lane.b32.xlu0 %v1460, %s1462
    %v1464 = vpop.permute.xlu0 %1463
    %v1465 = vlaneseq
    %v1466 = vshrl.u32 %v1465, 7
    %v1467 = vsub.s32 3, %v1466
    %v1468 = vrot.slane %v1440, %v1467
    %s1470 = sor.u32 256, 5
    %1471 = vbcast.lane.b32.xlu0 %v1468, %s1470
    %v1472 = vpop.permute.xlu0 %1471
    %v1473 = vlaneseq
    %v1474 = vshrl.u32 %v1473, 7
    %v1475 = vsub.s32 4, %v1474
    %v1476 = vrot.slane %v1440, %v1475
    %s1478 = sor.u32 256, 5
    %1479 = vbcast.lane.b32.xlu0 %v1476, %s1478
    %v1480 = vpop.permute.xlu0 %1479
    %v1481 = vlaneseq
    %v1482 = vshrl.u32 %v1481, 7
    %v1483 = vsub.s32 5, %v1482
    %v1484 = vrot.slane %v1440, %v1483
    %s1486 = sor.u32 256, 5
    %1487 = vbcast.lane.b32.xlu0 %v1484, %s1486
    %v1488 = vpop.permute.xlu0 %1487
    %v1489 = vlaneseq
    %v1490 = vshrl.u32 %v1489, 7
    %v1491 = vsub.s32 6, %v1490
    %v1492 = vrot.slane %v1440, %v1491
    %s1494 = sor.u32 256, 5
    %1495 = vbcast.lane.b32.xlu0 %v1492, %s1494
    %v1496 = vpop.permute.xlu0 %1495
    %v1497 = vlaneseq
    %v1498 = vshrl.u32 %v1497, 7
    %v1499 = vsub.s32 7, %v1498
    %v1500 = vrot.slane %v1440, %v1499
    %s1502 = sor.u32 256, 5
    %1503 = vbcast.lane.b32.xlu0 %v1500, %s1502
    %v1504 = vpop.permute.xlu0 %1503
    %v1505 = vmul.f32 %v1448, %v1060
    %v1506 = vmul.f32 %v1456, %v1064
    %v1507 = vmul.f32 %v1464, %v1068
    %v1508 = vmul.f32 %v1472, %v1072
    %v1509 = vmul.f32 %v1480, %v1076
    %v1510 = vmul.f32 %v1488, %v1080
    %v1511 = vmul.f32 %v1496, %v1084
    %v1512 = vmul.f32 %v1504, %v1088
    %v1513 = vsel %vm1105, %v1505, -inf
    %1514 = vmax.xlane.f32.xlu0 %v1513
    %v1515 = vpop.xlane.xlu0 %1514
    %v1516 = vsel %vm1105, %v1506, -inf
    %1517 = vmax.xlane.f32.xlu0 %v1516
    %v1518 = vpop.xlane.xlu0 %1517
    %v1519 = vsel %vm1105, %v1507, -inf
    %1520 = vmax.xlane.f32.xlu0 %v1519
    %v1521 = vpop.xlane.xlu0 %1520
    %v1522 = vsel %vm1105, %v1508, -inf
    %1523 = vmax.xlane.f32.xlu0 %v1522
    %v1524 = vpop.xlane.xlu0 %1523
    %v1525 = vsel %vm1105, %v1509, -inf
    %1526 = vmax.xlane.f32.xlu0 %v1525
    %v1527 = vpop.xlane.xlu0 %1526
    %v1528 = vsel %vm1105, %v1510, -inf
    %1529 = vmax.xlane.f32.xlu0 %v1528
    %v1530 = vpop.xlane.xlu0 %1529
    %v1531 = vsel %vm1105, %v1511, -inf
    %1532 = vmax.xlane.f32.xlu0 %v1531
    %v1533 = vpop.xlane.xlu0 %1532
    %v1534 = vsel %vm1105, %v1512, -inf
    %1535 = vmax.xlane.f32.xlu0 %v1534
    %v1536 = vpop.xlane.xlu0 %1535
    %v1537 = vsub.f32 %v1505, %v1515
    %v1538 = vsub.f32 %v1506, %v1518
    %v1539 = vsub.f32 %v1507, %v1521
    %v1540 = vsub.f32 %v1508, %v1524
    %v1541 = vsub.f32 %v1509, %v1527
    %v1542 = vsub.f32 %v1510, %v1530
    %v1543 = vsub.f32 %v1511, %v1533
    %v1544 = vsub.f32 %v1512, %v1536
    %v1545 = vmul.f32 %v1537, 1.442695
    %v1546 = vpow.pop %v1545
    %v1547 = vmul.f32 %v1538, 1.442695
    %v1548 = vpow.pop %v1547
    %v1549 = vmul.f32 %v1539, 1.442695
    %v1550 = vpow.pop %v1549
    %v1551 = vmul.f32 %v1540, 1.442695
    %v1552 = vpow.pop %v1551
    %v1553 = vmul.f32 %v1541, 1.442695
    %v1554 = vpow.pop %v1553
    %v1555 = vmul.f32 %v1542, 1.442695
    %v1556 = vpow.pop %v1555
    %v1557 = vmul.f32 %v1543, 1.442695
    %v1558 = vpow.pop %v1557
    %v1559 = vmul.f32 %v1544, 1.442695
    %v1560 = vpow.pop %v1559
    %1569 = vrot.lane.b32.xlu0 %v1546, 123
    %v1570 = vpop.permute.xlu0 %1569
    %1571 = vrot.lane.b32.xlu0 %v1548, 123
    %v1572 = vpop.permute.xlu0 %1571
    %1573 = vrot.lane.b32.xlu0 %v1550, 123
    %v1574 = vpop.permute.xlu0 %1573
    %1575 = vrot.lane.b32.xlu0 %v1552, 123
    %v1576 = vpop.permute.xlu0 %1575
    %1577 = vrot.lane.b32.xlu0 %v1554, 123
    %v1578 = vpop.permute.xlu0 %1577
    %1579 = vrot.lane.b32.xlu0 %v1556, 123
    %v1580 = vpop.permute.xlu0 %1579
    %1581 = vrot.lane.b32.xlu0 %v1558, 123
    %v1582 = vpop.permute.xlu0 %1581
    %1583 = vrot.lane.b32.xlu0 %v1560, 123
    %v1584 = vpop.permute.xlu0 %1583
    %v1593 = vsel %vm1186, %v1570, 0.0
    %1594 = vadd.xlane.f32.xlu0 %v1593
    %v1595 = vpop.xlane.xlu0 %1594
    %v1596 = vsel %vm1186, %v1572, 0.0
    %1597 = vadd.xlane.f32.xlu0 %v1596
    %v1598 = vpop.xlane.xlu0 %1597
    %v1599 = vsel %vm1186, %v1574, 0.0
    %1600 = vadd.xlane.f32.xlu0 %v1599
    %v1601 = vpop.xlane.xlu0 %1600
    %v1602 = vsel %vm1186, %v1576, 0.0
    %1603 = vadd.xlane.f32.xlu0 %v1602
    %v1604 = vpop.xlane.xlu0 %1603
    %v1605 = vsel %vm1186, %v1578, 0.0
    %1606 = vadd.xlane.f32.xlu0 %v1605
    %v1607 = vpop.xlane.xlu0 %1606
    %v1608 = vsel %vm1186, %v1580, 0.0
    %1609 = vadd.xlane.f32.xlu0 %v1608
    %v1610 = vpop.xlane.xlu0 %1609
    %v1611 = vsel %vm1186, %v1582, 0.0
    %1612 = vadd.xlane.f32.xlu0 %v1611
    %v1613 = vpop.xlane.xlu0 %1612
    %v1614 = vsel %vm1186, %v1584, 0.0
    %1615 = vadd.xlane.f32.xlu0 %v1614
    %v1616 = vpop.xlane.xlu0 %1615
    %v1617 = vrcp.pop %v1595
    %v1618 = vmul.f32 %v1546, %v1617
    %v1619 = vrcp.pop %v1598
    %v1620 = vmul.f32 %v1548, %v1619
    %v1621 = vrcp.pop %v1601
    %v1622 = vmul.f32 %v1550, %v1621
    %v1623 = vrcp.pop %v1604
    %v1624 = vmul.f32 %v1552, %v1623
    %v1625 = vrcp.pop %v1607
    %v1626 = vmul.f32 %v1554, %v1625
    %v1627 = vrcp.pop %v1610
    %v1628 = vmul.f32 %v1556, %v1627
    %v1629 = vrcp.pop %v1613
    %v1630 = vmul.f32 %v1558, %v1629
    %v1631 = vrcp.pop %v1616
    %v1632 = vmul.f32 %v1560, %v1631
    %v1633 = vmul.f32 %v1618, %v1060
    %v1634 = vmul.f32 %v1620, %v1064
    %v1635 = vmul.f32 %v1622, %v1068
    %v1636 = vmul.f32 %v1624, %v1072
    %v1637 = vmul.f32 %v1626, %v1076
    %v1638 = vmul.f32 %v1628, %v1080
    %v1639 = vmul.f32 %v1630, %v1084
    %v1640 = vmul.f32 %v1632, %v1088
    %1649 = vrot.lane.b32.xlu0 %v1633, 123
    %v1650 = vpop.permute.xlu0 %1649
    %1651 = vrot.lane.b32.xlu0 %v1634, 123
    %v1652 = vpop.permute.xlu0 %1651
    %1653 = vrot.lane.b32.xlu0 %v1635, 123
    %v1654 = vpop.permute.xlu0 %1653
    %1655 = vrot.lane.b32.xlu0 %v1636, 123
    %v1656 = vpop.permute.xlu0 %1655
    %1657 = vrot.lane.b32.xlu0 %v1637, 123
    %v1658 = vpop.permute.xlu0 %1657
    %1659 = vrot.lane.b32.xlu0 %v1638, 123
    %v1660 = vpop.permute.xlu0 %1659
    %1661 = vrot.lane.b32.xlu0 %v1639, 123
    %v1662 = vpop.permute.xlu0 %1661
    %1663 = vrot.lane.b32.xlu0 %v1640, 123
    %v1664 = vpop.permute.xlu0 %1663
    %v1673 = vsel %vm1186, %v1650, 0.0
    %1674 = vadd.xlane.f32.xlu0 %v1673
    %v1675 = vpop.xlane.xlu0 %1674
    %v1676 = vsel %vm1186, %v1652, 0.0
    %1677 = vadd.xlane.f32.xlu0 %v1676
    %v1678 = vpop.xlane.xlu0 %1677
    %v1679 = vsel %vm1186, %v1654, 0.0
    %1680 = vadd.xlane.f32.xlu0 %v1679
    %v1681 = vpop.xlane.xlu0 %1680
    %v1682 = vsel %vm1186, %v1656, 0.0
    %1683 = vadd.xlane.f32.xlu0 %v1682
    %v1684 = vpop.xlane.xlu0 %1683
    %v1685 = vsel %vm1186, %v1658, 0.0
    %1686 = vadd.xlane.f32.xlu0 %v1685
    %v1687 = vpop.xlane.xlu0 %1686
    %v1688 = vsel %vm1186, %v1660, 0.0
    %1689 = vadd.xlane.f32.xlu0 %v1688
    %v1690 = vpop.xlane.xlu0 %1689
    %v1691 = vsel %vm1186, %v1662, 0.0
    %1692 = vadd.xlane.f32.xlu0 %v1691
    %v1693 = vpop.xlane.xlu0 %1692
    %v1694 = vsel %vm1186, %v1664, 0.0
    %1695 = vadd.xlane.f32.xlu0 %v1694
    %v1696 = vpop.xlane.xlu0 %1695
    %v1697 = vlaneseq
    %v1698 = vshrl.u32 %v1697, 7
    %v1699 = vsub.s32 3, %v1698
    %v1700 = vrot.slane %v929, %v1699
    %v1701 = vmul.f32 %v1675, %v1700
    %v1702 = vmul.f32 %v1678, %v1700
    %v1703 = vmul.f32 %v1681, %v1700
    %v1704 = vmul.f32 %v1684, %v1700
    %v1705 = vmul.f32 %v1687, %v1700
    %v1706 = vmul.f32 %v1690, %v1700
    %v1707 = vmul.f32 %v1693, %v1700
    %v1708 = vmul.f32 %v1696, %v1700
    %v1709 = vlaneseq
    %v1710 = vshrl.u32 %v1709, 7
    %v1711 = vsub.s32 4, %v1710
    %v1712 = vrot.slane %v929, %v1711
    %v1713 = vadd.f32 %v1701, %v1712
    %v1714 = vadd.f32 %v1702, %v1712
    %v1715 = vadd.f32 %v1703, %v1712
    %v1716 = vadd.f32 %v1704, %v1712
    %v1717 = vadd.f32 %v1705, %v1712
    %v1718 = vadd.f32 %v1706, %v1712
    %v1719 = vadd.f32 %v1707, %v1712
    %v1720 = vadd.f32 %v1708, %v1712
    %v1721 = vxor.u32 %v1713, 2147483648
    %v1722 = vxor.u32 %v1714, 2147483648
    %v1723 = vxor.u32 %v1715, 2147483648
    %v1724 = vxor.u32 %v1716, 2147483648
    %v1725 = vxor.u32 %v1717, 2147483648
    %v1726 = vxor.u32 %v1718, 2147483648
    %v1727 = vxor.u32 %v1719, 2147483648
    %v1728 = vxor.u32 %v1720, 2147483648
    %v1729 = vmul.f32 %v1721, 1.442695
    %v1730 = vpow.pop %v1729
    %v1731 = vmul.f32 %v1722, 1.442695
    %v1732 = vpow.pop %v1731
    %v1733 = vmul.f32 %v1723, 1.442695
    %v1734 = vpow.pop %v1733
    %v1735 = vmul.f32 %v1724, 1.442695
    %v1736 = vpow.pop %v1735
    %v1737 = vmul.f32 %v1725, 1.442695
    %v1738 = vpow.pop %v1737
    %v1739 = vmul.f32 %v1726, 1.442695
    %v1740 = vpow.pop %v1739
    %v1741 = vmul.f32 %v1727, 1.442695
    %v1742 = vpow.pop %v1741
    %v1743 = vmul.f32 %v1728, 1.442695
    %v1744 = vpow.pop %v1743
    %v1745 = vadd.f32 %v1730, 1.0
    %v1746 = vadd.f32 %v1732, 1.0
    %v1747 = vadd.f32 %v1734, 1.0
    %v1748 = vadd.f32 %v1736, 1.0
    %v1749 = vadd.f32 %v1738, 1.0
    %v1750 = vadd.f32 %v1740, 1.0
    %v1751 = vadd.f32 %v1742, 1.0
    %v1752 = vadd.f32 %v1744, 1.0
    %v1753 = vrcp.pop %v1745
    %v1754 = vmul.f32 1.0, %v1753
    %v1755 = vrcp.pop %v1746
    %v1756 = vmul.f32 1.0, %v1755
    %v1757 = vrcp.pop %v1747
    %v1758 = vmul.f32 1.0, %v1757
    %v1759 = vrcp.pop %v1748
    %v1760 = vmul.f32 1.0, %v1759
    %v1761 = vrcp.pop %v1749
    %v1762 = vmul.f32 1.0, %v1761
    %v1763 = vrcp.pop %v1750
    %v1764 = vmul.f32 1.0, %v1763
    %v1765 = vrcp.pop %v1751
    %v1766 = vmul.f32 1.0, %v1765
    %v1767 = vrcp.pop %v1752
    %v1768 = vmul.f32 1.0, %v1767
    %v1769 = vsel %vm1363, %v1754, 0.0
    %v1770 = vrot.slane %v1769, 4
    %v1771 = vadd.f32 %v1769, %v1770
    %v1772 = vrot.slane %v1771, 2
    %v1773 = vadd.f32 %v1771, %v1772
    %v1774 = vrot.slane %v1773, 1
    %v1775 = vadd.f32 %v1773, %v1774
    %v1776 = vsel %vm1363, %v1756, 0.0
    %v1777 = vrot.slane %v1776, 4
    %v1778 = vadd.f32 %v1776, %v1777
    %v1779 = vrot.slane %v1778, 2
    %v1780 = vadd.f32 %v1778, %v1779
    %v1781 = vrot.slane %v1780, 1
    %v1782 = vadd.f32 %v1780, %v1781
    %v1783 = vsel %vm1363, %v1758, 0.0
    %v1784 = vrot.slane %v1783, 4
    %v1785 = vadd.f32 %v1783, %v1784
    %v1786 = vrot.slane %v1785, 2
    %v1787 = vadd.f32 %v1785, %v1786
    %v1788 = vrot.slane %v1787, 1
    %v1789 = vadd.f32 %v1787, %v1788
    %v1790 = vsel %vm1363, %v1760, 0.0
    %v1791 = vrot.slane %v1790, 4
    %v1792 = vadd.f32 %v1790, %v1791
    %v1793 = vrot.slane %v1792, 2
    %v1794 = vadd.f32 %v1792, %v1793
    %v1795 = vrot.slane %v1794, 1
    %v1796 = vadd.f32 %v1794, %v1795
    %v1797 = vsel %vm1363, %v1762, 0.0
    %v1798 = vrot.slane %v1797, 4
    %v1799 = vadd.f32 %v1797, %v1798
    %v1800 = vrot.slane %v1799, 2
    %v1801 = vadd.f32 %v1799, %v1800
    %v1802 = vrot.slane %v1801, 1
    %v1803 = vadd.f32 %v1801, %v1802
    %v1804 = vsel %vm1363, %v1764, 0.0
    %v1805 = vrot.slane %v1804, 4
    %v1806 = vadd.f32 %v1804, %v1805
    %v1807 = vrot.slane %v1806, 2
    %v1808 = vadd.f32 %v1806, %v1807
    %v1809 = vrot.slane %v1808, 1
    %v1810 = vadd.f32 %v1808, %v1809
    %v1811 = vsel %vm1363, %v1766, 0.0
    %v1812 = vrot.slane %v1811, 4
    %v1813 = vadd.f32 %v1811, %v1812
    %v1814 = vrot.slane %v1813, 2
    %v1815 = vadd.f32 %v1813, %v1814
    %v1816 = vrot.slane %v1815, 1
    %v1817 = vadd.f32 %v1815, %v1816
    %v1818 = vsel %vm1363, %v1768, 0.0
    %v1819 = vrot.slane %v1818, 4
    %v1820 = vadd.f32 %v1818, %v1819
    %v1821 = vrot.slane %v1820, 2
    %v1822 = vadd.f32 %v1820, %v1821
    %v1823 = vrot.slane %v1822, 1
    %v1824 = vadd.f32 %v1822, %v1823
    %v1825 = vmul.f32 %v1775, %v1420
    %v1826 = vmul.f32 %v1782, %v1420
    %v1827 = vmul.f32 %v1789, %v1420
    %v1828 = vmul.f32 %v1796, %v1420
    %v1829 = vmul.f32 %v1803, %v1420
    %v1830 = vmul.f32 %v1810, %v1420
    %v1831 = vmul.f32 %v1817, %v1420
    %v1832 = vmul.f32 %v1824, %v1420
    %v1841 = vsel %vm792, %v1422, %v1421
    %v1842 = vsel %vm794, %v1423, %v1841
    %v1843 = vsel %vm796, %v1424, %v1842
    %v1844 = vsel %vm798, %v1425, %v1843
    %v1845 = vsel %vm800, %v1426, %v1844
    %v1846 = vsel %vm802, %v1427, %v1845
    %v1847 = vsel %vm804, %v1428, %v1846
    %v1857 = vsel %vm792, %v1826, %v1825
    %v1858 = vsel %vm794, %v1827, %v1857
    %v1859 = vsel %vm796, %v1828, %v1858
    %v1860 = vsel %vm798, %v1829, %v1859
    %v1861 = vsel %vm800, %v1830, %v1860
    %v1862 = vsel %vm802, %v1831, %v1861
    %v1863 = vsel %vm804, %v1832, %v1862
    %1864 = vrot.lane.b32.xlu0 %v1863, 32
    %v1865 = vpop.permute.xlu0 %1864
    %v1867 = vsel %vm825, %v1847, %v1865
    %v1868 = vlaneseq
    %v1869 = vshrl.u32 %v1868, 7
    %v1870 = vsub.s32 0, %v1869
    %v1871 = vrot.slane %v929, %v1870
    %v1873 = vsel %vm831, %v1867, 0
    %1875 = vmatprep.subr.mxu0 0.0
    %1876 = vmatpush1.msra.mxu0 0.0
    %1877 = vmatprep.subr.mxu0 0.0
    %1878 = vmatpush1.msra.mxu0 0.0
    %1879 = vmatprep.subr.mxu0 0.0
    %1880 = vmatpush1.msra.mxu0 0.0
    %1881 = vmatprep.subr.mxu0 0.0
    %1882 = vmatpush1.msra.mxu0 0.0
    %1883 = vmatprep.subr.mxu0 0.0
    %1884 = vmatpush1.msra.mxu0 0.0
    %1885 = vmatprep.subr.mxu0 0.0
    %1886 = vmatpush1.msra.mxu0 0.0
    %1887 = vmatprep.subr.mxu0 0.0
    %1888 = vmatpush1.msra.mxu0 0.0
    %1889 = vmatprep.subr.mxu0 0.0
    %1890 = vmatpush1.msra.mxu0 0.0
    %1891 = vmatprep.subr.mxu0 0.0
    %1892 = vmatpush1.msra.mxu0 %v928
    %1893 = vmatprep.subr.mxu0 0.0
    %1894 = vmatpush1.msra.mxu0 %v927
    %1895 = vmatprep.subr.mxu0 0.0
    %1896 = vmatpush1.msra.mxu0 %v926
    %1897 = vmatprep.subr.mxu0 0.0
    %1898 = vmatpush1.msra.mxu0 %v925
    %1899 = vmatprep.subr.mxu0 0.0
    %1900 = vmatpush1.msra.mxu0 %v924
    %1901 = vmatprep.subr.mxu0 0.0
    %1902 = vmatpush1.msra.mxu0 %v923
    %1903 = vmatprep.subr.mxu0 0.0
    %1904 = vmatpush1.msra.mxu0 %v922
    %1905 = vmatprep.subr.mxu0 0.0
    %1906 = vmatpush1.msra.mxu0 %v921
    %1907 = vmatprep.subr.mxu0 0.0
    %1908 = vmatpush2.msra.mxu0 0.0
    %1909 = vmatprep.subr.mxu0 0.0
    %1910 = vmatpush2.msra.mxu0 0.0
    %1911 = vmatprep.subr.mxu0 0.0
    %1912 = vmatpush2.msra.mxu0 0.0
    %1913 = vmatprep.subr.mxu0 0.0
    %1914 = vmatpush2.msra.mxu0 0.0
    %1915 = vmatprep.subr.mxu0 0.0
    %1916 = vmatpush2.msra.mxu0 0.0
    %1917 = vmatprep.subr.mxu0 0.0
    %1918 = vmatpush2.msra.mxu0 0.0
    %1919 = vmatprep.subr.mxu0 0.0
    %1920 = vmatpush2.msra.mxu0 0.0
    %1921 = vmatprep.subr.mxu0 0.0
    %1922 = vmatpush2.msra.mxu0 0.0
    %1923 = vmatprep.subr.mxu0 0.0
    %1924 = vmatpush2.msra.mxu0 0.0
    %1925 = vmatprep.subr.mxu0 0.0
    %1926 = vmatpush2.msra.mxu0 0.0
    %1927 = vmatprep.subr.mxu0 0.0
    %1928 = vmatpush2.msra.mxu0 0.0
    %1929 = vmatprep.subr.mxu0 0.0
    %1930 = vmatpush2.msra.mxu0 0.0
    %1931 = vmatprep.subr.mxu0 0.0
    %1932 = vmatpush2.msra.mxu0 0.0
    %1933 = vmatprep.subr.mxu0 0.0
    %1934 = vmatpush2.msra.mxu0 0.0
    %1935 = vmatprep.subr.mxu0 0.0
    %1936 = vmatpush2.msra.mxu0 0.0
    %1937 = vmatprep.subr.mxu0 0.0
    %1938 = vmatpush2.msra.mxu0 0.0
    %1939 = vmatprep.mubr.f32.mxu0 0.0
    %1940 = vmatmul.mubr.f32.gmra.mxu0 %v1873
    %v1941 = vpop.f32.mrf.mxu0
    %v1942 = vadd.f32 %v1871, %v1941
    %v1943 = vpop.f32.mrf.mxu0
    %1944 = vdwg.mxu0
    %v1945 = vmul.f32 %v1942, 1.442695
    %v1946 = vpow.pop %v1945
    %v1947 = vmul.f32 %v930, %v1946
    %1949 = vrot.lane.b32.xlu0 %v1942, 123
    %v1950 = vpop.permute.xlu0 %1949
    %v1952 = vadd.f32 %v1947, %v1950
    %vm1953 = vcmask 39936
    %v1954 = vsel %vm1953, %v1942, 0.0
    %1955 = vadd.xlane.f32.xlu0 %v1954
    %v1956 = vpop.xlane.xlu0 %1955
    %v1957 = vadd.f32 %v917, %v1956
    %1958 = vst.msk [vmem:[#allocation2] sm:$0xff] %vm1953, %v1952
    %v1959 = vld [vmem:[#allocation2] sm:$0xff]
    %1960 = vst.msk [vmem:[#allocation3] sm:$0xff] %vm15, %v1959
    %v1961 = vmul.f32 %v1959, %v1959
    %v1962 = vsel %vm15, %v1961, 0.0
    %1963 = vadd.xlane.f32.xlu0 %v1962
    %v1964 = vpop.xlane.xlu0 %1963
    %v1965 = vmul.f32 %v1964, -0.5
    %v1966 = vsub.f32 %v1965, 7.351508
    %vm1967 = vcmask 7168
    %v1968 = vsel %vm1967, %v1966, %v1957
    %vm1969 = vcmask 15360
    %1970 = vst.msk [vmem:[%s3] sm:$0xff] %vm1969, %v1968
    // Predicated region
    $region10: #{tpu_custom_call.1} parent=1 // pred_check
      _
    $region11: #{tpu_custom_call.1} parent=1 // pred_check_branch
      %1972 = sbr.rel (0) target = $region13
    $region12: #{tpu_custom_call.1} parent=1 // pred_region
      %s1974 = ssub.s32 128, 128
      %1975 = vsyncadd [#allocation4], %s1974
      %s1977 = sshll.u32 [#allocation3], 4
      %s1978 = int_to_ptr.vmem [resolvable:$true] %s1977
      %1980 = dma.vmem_to_hbm [thread:$0]  %s1978, 128, %s2, [#allocation4]
    $region13: #{tpu_custom_call.1} parent=1 // pred_fallthru
      _
    // Predicated region
    $region14: #{tpu_custom_call.1} parent=1 // pred_check
      _
    $region15: #{tpu_custom_call.1} parent=1 // pred_check_branch
      %1982 = sbr.rel (0) target = $region17
    $region16: #{tpu_custom_call.1} parent=1 // pred_region
      _
    $region17: #{tpu_custom_call.1} parent=1 // pred_fallthru
      _
    // Predicated region
    $region18: #{tpu_custom_call.1} parent=1 // pred_check
      _
    $region19: #{tpu_custom_call.1} parent=1 // pred_check_branch
      %1984 = sbr.rel (0) target = $region21
    $region20: #{tpu_custom_call.1} parent=1 // pred_region
      %1985 = dma.done [#allocation4], 128
    $region21: #{tpu_custom_call.1} parent=1 // pred_fallthru
      _
    // Predicated region
    $region22: #{tpu_custom_call.1} parent=1 // pred_check
      _
    $region23: #{tpu_custom_call.1} parent=1 // pred_check_branch
      %1987 = sbr.rel (0) target = $region25
    $region24: #{tpu_custom_call.1} parent=1 // pred_region
      _
    $region25: #{tpu_custom_call.1} parent=1 // pred_fallthru
      _
    %1988 = vsyncpa [#allocation4], 1

</llo_original>
